<compile_context>
chip_gen: v6e
topology: v6e:2x2x1
jax: 0.10.0
libtpu: 0.0.40
codegen_flags: <defaults>
</compile_context>

<pallas_src>
import functools

import jax
import jax.numpy as jnp
from jax import lax
from jax.experimental import pallas as pl
from jax.experimental.pallas import tpu as pltpu


def _round_up(x, m):
    return ((x + m - 1) // m) * m


def _graph_transformer_kernel(
    # inputs
    x_full_ref, x_tile_ref, adj_ref,
    w_in_ref, b_in_ref,
    wq_ref, bq_ref, wk_ref, bk_ref, wv_ref, bv_ref,
    wo_ref, bo_ref,
    w1_ref, b1_ref, w2_ref, b2_ref,
    g1_ref, be1_ref, g2_ref, be2_ref,
    # outputs
    out_ref,
    # scratch
    attn_buf,
    *, num_heads, head_dim, n_real, n_pad,
):
    f32 = jnp.float32
    eps = 1e-5
    inv_h = 1.0 / num_heads
    scale = 1.0 / (head_dim ** 0.5)

    # ---- projections over ALL nodes (needed for K / V) ----------------------
    # x_full has a constant index_map -> fetched once, resident across the row
    # grid.  K/V are recomputed per row tile; for out_features << TQ this is a
    # small fraction of the O(TQ*N*F) attention work.
    # TODO(synk): for very large graphs split the QKV projection into its own
    # row-gridded pallas_call so K/V are computed exactly once.
    x_all = x_full_ref[...]
    xp_all = jnp.dot(x_all, w_in_ref[...], preferred_element_type=f32) + b_in_ref[...]
    k_all = jnp.dot(xp_all, wk_ref[...], preferred_element_type=f32) + bk_ref[...]
    v_all = jnp.dot(xp_all, wv_ref[...], preferred_element_type=f32) + bv_ref[...]

    # ---- this row tile: input proj + queries (scale folded into q once) -----
    x_t = x_tile_ref[...]
    xp_t = jnp.dot(x_t, w_in_ref[...], preferred_element_type=f32) + b_in_ref[...]
    q_t = (jnp.dot(xp_t, wq_ref[...], preferred_element_type=f32) + bq_ref[...]) * scale

    # ---- per-head scores, stacked to (H, TQ, N) ------------------------------
    # dot_general contracts the last dim of q against the last dim of k, so no
    # explicit k.T (XLU transpose) is materialized.
    scores = []
    for h in range(num_heads):
        qh = q_t[:, h * head_dim:(h + 1) * head_dim]
        kh = k_all[:, h * head_dim:(h + 1) * head_dim]
        scores.append(lax.dot_general(
            qh, kh, (((1,), (1,)), ((), ())), preferred_element_type=f32))
    s = jnp.stack(scores, axis=0)                       # (H, TQ, N)

    # ---- softmax over the HEADS axis (reference: F.softmax(scores, dim=1)) --
    m = jnp.max(s, axis=0)                              # (TQ, N)
    e = jnp.exp(s - m[None])                            # (H, TQ, N)
    denom = jnp.sum(e, axis=0)                          # (TQ, N)
    w = e * pl.reciprocal(denom, approx=True)[None]     # (H, TQ, N)

    # masked_fill(-1e9) followed by a softmax over heads with a head-independent
    # mask is exactly "uniform 1/H at non-edges": apply it as a single select.
    mask = adj_ref[...].astype(f32) > 0.0               # (TQ, N) bool
    w = jnp.where(mask[None, :, :], w, inv_h)
    if n_pad > n_real:
        # Padded key columns must not contribute (their V rows are bias-only).
        col_valid = lax.broadcasted_iota(jnp.int32, (1, 1, n_pad), 2) < n_real
        w = jnp.where(col_valid, w, 0.0)

    # ---- attention output: head slabs into a lane-contiguous VMEM buffer -----
    for h in range(num_heads):
        vh = v_all[:, h * head_dim:(h + 1) * head_dim]
        attn_buf[:, h * head_dim:(h + 1) * head_dim] = jnp.dot(
            w[h], vh, preferred_element_type=f32)

    attn = jnp.dot(attn_buf[...], wo_ref[...], preferred_element_type=f32) + bo_ref[...]

    # ---- residual + LayerNorm 1 ----------------------------------------------
    h1 = xp_t + attn
    mu1 = jnp.mean(h1, axis=-1, keepdims=True)
    var1 = jnp.mean((h1 - mu1) ** 2, axis=-1, keepdims=True)
    x1 = (h1 - mu1) * lax.rsqrt(var1 + eps) * g1_ref[...] + be1_ref[...]

    # ---- FFN -------------------------------------------------------------------
    f = jnp.dot(x1, w1_ref[...], preferred_element_type=f32) + b1_ref[...]
    f = jnp.maximum(f, 0.0)
    f = jnp.dot(f, w2_ref[...], preferred_element_type=f32) + b2_ref[...]

    # ---- residual + LayerNorm 2 ------------------------------------------------
    h2 = x1 + f
    mu2 = jnp.mean(h2, axis=-1, keepdims=True)
    var2 = jnp.mean((h2 - mu2) ** 2, axis=-1, keepdims=True)
    out_ref[...] = (h2 - mu2) * lax.rsqrt(var2 + eps) * g2_ref[...] + be2_ref[...]


def graph_transformer_layer(x, edge_index, params, *, num_heads):
    """x: (N, in_features) f32, edge_index: (2, E) int32."""
    n, f_in = x.shape
    f_out = params["wq"].shape[1]
    assert f_out % num_heads == 0, "out_features must be divisible by num_heads"
    head_dim = f_out // num_heads

    # Row-tile size: multiple of 8 sublanes, at most 256 rows per grid step.
    tq = min(256, _round_up(n, 8))
    n_pad = _round_up(n, tq)

    # Dense {0,1} adjacency from edge_index (plain-JAX scatter glue), shipped
    # as bf16 (exact for {0,1}) to halve its DMA / VMEM footprint.
    adj = jnp.zeros((n, n), jnp.float32).at[edge_index[0], edge_index[1]].set(1.0)
    if n_pad > n:
        x = jnp.pad(x, ((0, n_pad - n), (0, 0)))
        adj = jnp.pad(adj, ((0, n_pad - n), (0, n_pad - n)))
    adj = adj.astype(jnp.bfloat16)

    args = (
        x, x, adj,
        params["w_in"], params["b_in"],
        params["wq"], params["bq"],
        params["wk"], params["bk"],
        params["wv"], params["bv"],
        params["wo"], params["bo"],
        params["w1"], params["b1"],
        params["w2"], params["b2"],
        params["g1"], params["be1"],
        params["g2"], params["be2"],
    )

    def _resident(a):
        # Full array, constant index map -> DMA'd once, stays resident in VMEM.
        return pl.BlockSpec(a.shape, lambda i: (0,) * a.ndim)

    in_specs = [
        _resident(x),                                 # x_full (K/V source)
        pl.BlockSpec((tq, f_in), lambda i: (i, 0)),   # x row tile (queries/residual)
        pl.BlockSpec((tq, n_pad), lambda i: (i, 0)),  # adjacency row tile (bf16)
    ] + [_resident(a) for a in args[3:]]

    kernel = functools.partial(
        _graph_transformer_kernel,
        num_heads=num_heads, head_dim=head_dim, n_real=n, n_pad=n_pad)

    out = pl.pallas_call(
        kernel,
        out_shape=jax.ShapeDtypeStruct((n_pad, f_out), jnp.float32),
        grid_spec=pltpu.PrefetchScalarGridSpec(
            num_scalar_prefetch=0,
            grid=(n_pad // tq,),
            in_specs=in_specs,
            out_specs=pl.BlockSpec((tq, f_out), lambda i: (i, 0)),
            scratch_shapes=[pltpu.VMEM((tq, f_out), jnp.float32)],
        ),
        compiler_params=pltpu.CompilerParams(
            dimension_semantics=("parallel",),
            # above the 16/32 MiB scoped defaults, below v7x's 64 MiB physical
            vmem_limit_bytes=48 * 1024 * 1024,
        ),
    )(*args)
    return out[:n]


def init_params(key, in_features, out_features):
    # Note: the reference uses nn.Identity for input_proj when
    # in_features == out_features; in that case pass w_in=I, b_in=0.
    ks = jax.random.split(key, 8)

    def lin(k, fin, fout):
        kw, kb = jax.random.split(k)
        bound = 1.0 / (fin ** 0.5)
        w = jax.random.uniform(kw, (fin, fout), jnp.float32, -bound, bound)
        b = jax.random.uniform(kb, (1, fout), jnp.float32, -bound, bound)
        return w, b

    w_in, b_in = lin(ks[0], in_features, out_features)
    wq, bq = lin(ks[1], out_features, out_features)
    wk, bk = lin(ks[2], out_features, out_features)
    wv, bv = lin(ks[3], out_features, out_features)
    wo, bo = lin(ks[4], out_features, out_features)
    w1, b1 = lin(ks[5], out_features, out_features * 2)
    w2, b2 = lin(ks[6], out_features * 2, out_features)

    return dict(
        w_in=w_in, b_in=b_in,
        wq=wq, bq=bq, wk=wk, bk=bk, wv=wv, bv=bv,
        wo=wo, bo=bo,
        w1=w1, b1=b1, w2=w2, b2=b2,
        g1=jnp.ones((1, out_features), jnp.float32),
        be1=jnp.zeros((1, out_features), jnp.float32),
        g2=jnp.ones((1, out_features), jnp.float32),
        be2=jnp.zeros((1, out_features), jnp.float32),
    )


if __name__ == "__main__":
    N = 8               # number of graph nodes
    IN_FEATURES = 16
    OUT_FEATURES = 32
    NUM_HEADS = 4

    key = jax.random.PRNGKey(0)
    k_x, k_p = jax.random.split(key)

    x = jax.random.normal(k_x, (N, IN_FEATURES), jnp.float32)

    # Deterministic edge list: ring graph + self-loops.
    src = jnp.concatenate([jnp.arange(N), jnp.arange(N)])
    dst = jnp.concatenate([(jnp.arange(N) + 1) % N, jnp.arange(N)])
    edge_index = jnp.stack([src, dst]).astype(jnp.int32)   # (2, 2N)

    params = init_params(k_p, IN_FEATURES, OUT_FEATURES)

    out = graph_transformer_layer(x, edge_index, params, num_heads=NUM_HEADS)
    jax.block_until_ready(out)
    assert out.shape == (N, OUT_FEATURES)
    print("KERNEL_OK")
</pallas_src>

<mosaic_0001>
module attributes {stable_mosaic.version = 11 : i64} {
  func.func @_graph_transformer_kernel(%arg0: i32, %arg1: memref<8x16xf32, #tpu.memory_space<vmem>>, %arg2: memref<8x16xf32, #tpu.memory_space<vmem>>, %arg3: memref<8x8xbf16, #tpu.memory_space<vmem>>, %arg4: memref<16x32xf32, #tpu.memory_space<vmem>>, %arg5: memref<1x32xf32, #tpu.memory_space<vmem>>, %arg6: memref<32x32xf32, #tpu.memory_space<vmem>>, %arg7: memref<1x32xf32, #tpu.memory_space<vmem>>, %arg8: memref<32x32xf32, #tpu.memory_space<vmem>>, %arg9: memref<1x32xf32, #tpu.memory_space<vmem>>, %arg10: memref<32x32xf32, #tpu.memory_space<vmem>>, %arg11: memref<1x32xf32, #tpu.memory_space<vmem>>, %arg12: memref<32x32xf32, #tpu.memory_space<vmem>>, %arg13: memref<1x32xf32, #tpu.memory_space<vmem>>, %arg14: memref<32x64xf32, #tpu.memory_space<vmem>>, %arg15: memref<1x64xf32, #tpu.memory_space<vmem>>, %arg16: memref<64x32xf32, #tpu.memory_space<vmem>>, %arg17: memref<1x32xf32, #tpu.memory_space<vmem>>, %arg18: memref<1x32xf32, #tpu.memory_space<vmem>>, %arg19: memref<1x32xf32, #tpu.memory_space<vmem>>, %arg20: memref<1x32xf32, #tpu.memory_space<vmem>>, %arg21: memref<1x32xf32, #tpu.memory_space<vmem>>, %arg22: memref<8x32xf32, #tpu.memory_space<vmem>>, %arg23: memref<8x32xf32, #tpu.memory_space<vmem>>) attributes {dimension_semantics = [#tpu.dimension_semantics<parallel>], iteration_bounds = array<i64: 1>, scalar_prefetch = 0 : i64, scratch_operands = 1 : i64, tpu.core_type = #tpu.core_type<tc>, window_params = [{pipeline_mode = #tpu.pipeline_mode<synchronous>, transform_indices = @transform_0, window_bounds = array<i64: 8, 16>}, {transform_indices = @transform_1, window_bounds = array<i64: 8, 16>}, {transform_indices = @transform_2, window_bounds = array<i64: 8, 8>}, {pipeline_mode = #tpu.pipeline_mode<synchronous>, transform_indices = @transform_3, window_bounds = array<i64: 16, 32>}, {pipeline_mode = #tpu.pipeline_mode<synchronous>, transform_indices = @transform_4, window_bounds = array<i64: 1, 32>}, {pipeline_mode = #tpu.pipeline_mode<synchronous>, transform_indices = @transform_5, window_bounds = array<i64: 32, 32>}, {pipeline_mode = #tpu.pipeline_mode<synchronous>, transform_indices = @transform_6, window_bounds = array<i64: 1, 32>}, {pipeline_mode = #tpu.pipeline_mode<synchronous>, transform_indices = @transform_7, window_bounds = array<i64: 32, 32>}, {pipeline_mode = #tpu.pipeline_mode<synchronous>, transform_indices = @transform_8, window_bounds = array<i64: 1, 32>}, {pipeline_mode = #tpu.pipeline_mode<synchronous>, transform_indices = @transform_9, window_bounds = array<i64: 32, 32>}, {pipeline_mode = #tpu.pipeline_mode<synchronous>, transform_indices = @transform_10, window_bounds = array<i64: 1, 32>}, {pipeline_mode = #tpu.pipeline_mode<synchronous>, transform_indices = @transform_11, window_bounds = array<i64: 32, 32>}, {pipeline_mode = #tpu.pipeline_mode<synchronous>, transform_indices = @transform_12, window_bounds = array<i64: 1, 32>}, {pipeline_mode = #tpu.pipeline_mode<synchronous>, transform_indices = @transform_13, window_bounds = array<i64: 32, 64>}, {pipeline_mode = #tpu.pipeline_mode<synchronous>, transform_indices = @transform_14, window_bounds = array<i64: 1, 64>}, {pipeline_mode = #tpu.pipeline_mode<synchronous>, transform_indices = @transform_15, window_bounds = array<i64: 64, 32>}, {pipeline_mode = #tpu.pipeline_mode<synchronous>, transform_indices = @transform_16, window_bounds = array<i64: 1, 32>}, {pipeline_mode = #tpu.pipeline_mode<synchronous>, transform_indices = @transform_17, window_bounds = array<i64: 1, 32>}, {pipeline_mode = #tpu.pipeline_mode<synchronous>, transform_indices = @transform_18, window_bounds = array<i64: 1, 32>}, {pipeline_mode = #tpu.pipeline_mode<synchronous>, transform_indices = @transform_19, window_bounds = array<i64: 1, 32>}, {pipeline_mode = #tpu.pipeline_mode<synchronous>, transform_indices = @transform_20, window_bounds = array<i64: 1, 32>}, {transform_indices = @transform_21, window_bounds = array<i64: 8, 32>}]} {
    %c0 = arith.constant 0 : index
    %c0_0 = arith.constant 0 : index
    %0 = vector.load %arg1[%c0, %c0_0] : memref<8x16xf32, #tpu.memory_space<vmem>>, vector<8x16xf32>
    %c0_1 = arith.constant 0 : index
    %c0_2 = arith.constant 0 : index
    %1 = vector.load %arg4[%c0_1, %c0_2] : memref<16x32xf32, #tpu.memory_space<vmem>>, vector<16x32xf32>
    %cst = arith.constant dense<0.000000e+00> : vector<8x32xf32>
    %2 = tpu.matmul %0, %1, %cst {dimension_numbers = #tpu.dot_dimension_numbers<[1], [0], [0], [1], [0, 0, 1, 1], [], []>} : vector<8x16xf32>, vector<16x32xf32>, vector<8x32xf32> -> vector<8x32xf32>
    %c0_3 = arith.constant 0 : index
    %c0_4 = arith.constant 0 : index
    %3 = vector.load %arg5[%c0_3, %c0_4] : memref<1x32xf32, #tpu.memory_space<vmem>>, vector<1x32xf32>
    %4 = vector.broadcast %3 : vector<1x32xf32> to vector<8x32xf32>
    %5 = arith.addf %2, %4 : vector<8x32xf32>
    %c0_5 = arith.constant 0 : index
    %c0_6 = arith.constant 0 : index
    %6 = vector.load %arg8[%c0_5, %c0_6] : memref<32x32xf32, #tpu.memory_space<vmem>>, vector<32x32xf32>
    %cst_7 = arith.constant dense<0.000000e+00> : vector<8x32xf32>
    %7 = tpu.matmul %5, %6, %cst_7 {dimension_numbers = #tpu.dot_dimension_numbers<[1], [0], [0], [1], [0, 0, 1, 1], [], []>} : vector<8x32xf32>, vector<32x32xf32>, vector<8x32xf32> -> vector<8x32xf32>
    %c0_8 = arith.constant 0 : index
    %c0_9 = arith.constant 0 : index
    %8 = vector.load %arg9[%c0_8, %c0_9] : memref<1x32xf32, #tpu.memory_space<vmem>>, vector<1x32xf32>
    %9 = vector.broadcast %8 : vector<1x32xf32> to vector<8x32xf32>
    %10 = arith.addf %7, %9 : vector<8x32xf32>
    %c0_10 = arith.constant 0 : index
    %c0_11 = arith.constant 0 : index
    %11 = vector.load %arg10[%c0_10, %c0_11] : memref<32x32xf32, #tpu.memory_space<vmem>>, vector<32x32xf32>
    %cst_12 = arith.constant dense<0.000000e+00> : vector<8x32xf32>
    %12 = tpu.matmul %5, %11, %cst_12 {dimension_numbers = #tpu.dot_dimension_numbers<[1], [0], [0], [1], [0, 0, 1, 1], [], []>} : vector<8x32xf32>, vector<32x32xf32>, vector<8x32xf32> -> vector<8x32xf32>
    %c0_13 = arith.constant 0 : index
    %c0_14 = arith.constant 0 : index
    %13 = vector.load %arg11[%c0_13, %c0_14] : memref<1x32xf32, #tpu.memory_space<vmem>>, vector<1x32xf32>
    %14 = vector.broadcast %13 : vector<1x32xf32> to vector<8x32xf32>
    %15 = arith.addf %12, %14 : vector<8x32xf32>
    %c0_15 = arith.constant 0 : index
    %c0_16 = arith.constant 0 : index
    %16 = vector.load %arg2[%c0_15, %c0_16] : memref<8x16xf32, #tpu.memory_space<vmem>>, vector<8x16xf32>
    %c0_17 = arith.constant 0 : index
    %c0_18 = arith.constant 0 : index
    %17 = vector.load %arg4[%c0_17, %c0_18] : memref<16x32xf32, #tpu.memory_space<vmem>>, vector<16x32xf32>
    %cst_19 = arith.constant dense<0.000000e+00> : vector<8x32xf32>
    %18 = tpu.matmul %16, %17, %cst_19 {dimension_numbers = #tpu.dot_dimension_numbers<[1], [0], [0], [1], [0, 0, 1, 1], [], []>} : vector<8x16xf32>, vector<16x32xf32>, vector<8x32xf32> -> vector<8x32xf32>
    %c0_20 = arith.constant 0 : index
    %c0_21 = arith.constant 0 : index
    %19 = vector.load %arg5[%c0_20, %c0_21] : memref<1x32xf32, #tpu.memory_space<vmem>>, vector<1x32xf32>
    %20 = vector.broadcast %19 : vector<1x32xf32> to vector<8x32xf32>
    %21 = arith.addf %18, %20 : vector<8x32xf32>
    %c0_22 = arith.constant 0 : index
    %c0_23 = arith.constant 0 : index
    %22 = vector.load %arg6[%c0_22, %c0_23] : memref<32x32xf32, #tpu.memory_space<vmem>>, vector<32x32xf32>
    %cst_24 = arith.constant dense<0.000000e+00> : vector<8x32xf32>
    %23 = tpu.matmul %21, %22, %cst_24 {dimension_numbers = #tpu.dot_dimension_numbers<[1], [0], [0], [1], [0, 0, 1, 1], [], []>} : vector<8x32xf32>, vector<32x32xf32>, vector<8x32xf32> -> vector<8x32xf32>
    %c0_25 = arith.constant 0 : index
    %c0_26 = arith.constant 0 : index
    %24 = vector.load %arg7[%c0_25, %c0_26] : memref<1x32xf32, #tpu.memory_space<vmem>>, vector<1x32xf32>
    %25 = vector.broadcast %24 : vector<1x32xf32> to vector<8x32xf32>
    %26 = arith.addf %23, %25 : vector<8x32xf32>
    %cst_27 = arith.constant 0.353553385 : f32
    %27 = vector.broadcast %cst_27 : f32 to vector<8x32xf32>
    %28 = arith.mulf %26, %27 : vector<8x32xf32>
    %29 = vector.extract_strided_slice %28 {offsets = [0, 0], sizes = [8, 8], strides = [1, 1]} : vector<8x32xf32> to vector<8x8xf32>
    %30 = vector.extract_strided_slice %10 {offsets = [0, 0], sizes = [8, 8], strides = [1, 1]} : vector<8x32xf32> to vector<8x8xf32>
    %cst_28 = arith.constant dense<0.000000e+00> : vector<8x8xf32>
    %31 = tpu.matmul %29, %30, %cst_28 {dimension_numbers = #tpu.dot_dimension_numbers<[1], [1], [0], [0], [0, 0, 1, 0], [], []>} : vector<8x8xf32>, vector<8x8xf32>, vector<8x8xf32> -> vector<8x8xf32>
    %32 = vector.extract_strided_slice %28 {offsets = [0, 8], sizes = [8, 8], strides = [1, 1]} : vector<8x32xf32> to vector<8x8xf32>
    %33 = vector.extract_strided_slice %10 {offsets = [0, 8], sizes = [8, 8], strides = [1, 1]} : vector<8x32xf32> to vector<8x8xf32>
    %cst_29 = arith.constant dense<0.000000e+00> : vector<8x8xf32>
    %34 = tpu.matmul %32, %33, %cst_29 {dimension_numbers = #tpu.dot_dimension_numbers<[1], [1], [0], [0], [0, 0, 1, 0], [], []>} : vector<8x8xf32>, vector<8x8xf32>, vector<8x8xf32> -> vector<8x8xf32>
    %35 = vector.extract_strided_slice %28 {offsets = [0, 16], sizes = [8, 8], strides = [1, 1]} : vector<8x32xf32> to vector<8x8xf32>
    %36 = vector.extract_strided_slice %10 {offsets = [0, 16], sizes = [8, 8], strides = [1, 1]} : vector<8x32xf32> to vector<8x8xf32>
    %cst_30 = arith.constant dense<0.000000e+00> : vector<8x8xf32>
    %37 = tpu.matmul %35, %36, %cst_30 {dimension_numbers = #tpu.dot_dimension_numbers<[1], [1], [0], [0], [0, 0, 1, 0], [], []>} : vector<8x8xf32>, vector<8x8xf32>, vector<8x8xf32> -> vector<8x8xf32>
    %38 = vector.extract_strided_slice %28 {offsets = [0, 24], sizes = [8, 8], strides = [1, 1]} : vector<8x32xf32> to vector<8x8xf32>
    %39 = vector.extract_strided_slice %10 {offsets = [0, 24], sizes = [8, 8], strides = [1, 1]} : vector<8x32xf32> to vector<8x8xf32>
    %cst_31 = arith.constant dense<0.000000e+00> : vector<8x8xf32>
    %40 = tpu.matmul %38, %39, %cst_31 {dimension_numbers = #tpu.dot_dimension_numbers<[1], [1], [0], [0], [0, 0, 1, 0], [], []>} : vector<8x8xf32>, vector<8x8xf32>, vector<8x8xf32> -> vector<8x8xf32>
    %41 = vector.shape_cast %31 : vector<8x8xf32> to vector<1x8x8xf32>
    %42 = vector.shape_cast %34 : vector<8x8xf32> to vector<1x8x8xf32>
    %43 = vector.shape_cast %37 : vector<8x8xf32> to vector<1x8x8xf32>
    %44 = vector.shape_cast %40 : vector<8x8xf32> to vector<1x8x8xf32>
    %45 = tpu.concatenate %41, %42, %43, %44 in 0 : vector<1x8x8xf32>, vector<1x8x8xf32>, vector<1x8x8xf32>, vector<1x8x8xf32> -> vector<4x8x8xf32>
    %cst_32 = arith.constant dense<0xFF800000> : vector<8x8xf32>
    %46 = vector.multi_reduction <maximumf>, %45, %cst_32 [0] : vector<4x8x8xf32> to vector<8x8xf32>
    %47 = vector.shape_cast %46 : vector<8x8xf32> to vector<1x8x8xf32>
    %48 = vector.broadcast %47 : vector<1x8x8xf32> to vector<4x8x8xf32>
    %49 = arith.subf %45, %48 : vector<4x8x8xf32>
    %50 = math.exp %49 : vector<4x8x8xf32>
    %cst_33 = arith.constant dense<0.000000e+00> : vector<8x8xf32>
    %51 = vector.multi_reduction <add>, %50, %cst_33 [0] : vector<4x8x8xf32> to vector<8x8xf32>
    %52 = tpu.reciprocal %51 {approx = true} : vector<8x8xf32> -> vector<8x8xf32>
    %53 = vector.shape_cast %52 : vector<8x8xf32> to vector<1x8x8xf32>
    %54 = vector.broadcast %53 : vector<1x8x8xf32> to vector<4x8x8xf32>
    %55 = arith.mulf %50, %54 : vector<4x8x8xf32>
    %c0_34 = arith.constant 0 : index
    %c0_35 = arith.constant 0 : index
    %56 = vector.load %arg3[%c0_34, %c0_35] : memref<8x8xbf16, #tpu.memory_space<vmem>>, vector<8x8xbf16>
    %57 = arith.extf %56 : vector<8x8xbf16> to vector<8x8xf32>
    %cst_36 = arith.constant 0.000000e+00 : f32
    %58 = vector.broadcast %cst_36 : f32 to vector<8x8xf32>
    %59 = arith.cmpf ogt, %57, %58 : vector<8x8xf32>
    %60 = vector.shape_cast %59 : vector<8x8xi1> to vector<1x8x8xi1>
    %cst_37 = arith.constant 2.500000e-01 : f32
    %61 = vector.shape_cast %60 : vector<1x8x8xi1> to vector<1x8x8xi1>
    %62 = vector.broadcast %61 : vector<1x8x8xi1> to vector<4x8x8xi1>
    %63 = vector.broadcast %cst_37 : f32 to vector<4x8x8xf32>
    %64 = arith.select %62, %55, %63 : vector<4x8x8xi1>, vector<4x8x8xf32>
    %65 = vector.extract_strided_slice %15 {offsets = [0, 0], sizes = [8, 8], strides = [1, 1]} : vector<8x32xf32> to vector<8x8xf32>
    %66 = vector.extract_strided_slice %64 {offsets = [0, 0, 0], sizes = [1, 8, 8], strides = [1, 1, 1]} : vector<4x8x8xf32> to vector<1x8x8xf32>
    %67 = vector.shape_cast %66 : vector<1x8x8xf32> to vector<8x8xf32>
    %cst_38 = arith.constant dense<0.000000e+00> : vector<8x8xf32>
    %68 = tpu.matmul %67, %65, %cst_38 {dimension_numbers = #tpu.dot_dimension_numbers<[1], [0], [0], [1], [0, 0, 1, 1], [], []>} : vector<8x8xf32>, vector<8x8xf32>, vector<8x8xf32> -> vector<8x8xf32>
    %c0_39 = arith.constant 0 : index
    %c0_40 = arith.constant 0 : index
    %69 = vector.load %arg23[%c0_39, %c0_40] : memref<8x32xf32, #tpu.memory_space<vmem>>, vector<8x8xf32>
    tpu.vector_store %arg23[%c0_39, %c0_40], %68 {strides = array<i32>} : memref<8x32xf32, #tpu.memory_space<vmem>>, vector<8x8xf32>,
    %70 = vector.extract_strided_slice %15 {offsets = [0, 8], sizes = [8, 8], strides = [1, 1]} : vector<8x32xf32> to vector<8x8xf32>
    %71 = vector.extract_strided_slice %64 {offsets = [1, 0, 0], sizes = [1, 8, 8], strides = [1, 1, 1]} : vector<4x8x8xf32> to vector<1x8x8xf32>
    %72 = vector.shape_cast %71 : vector<1x8x8xf32> to vector<8x8xf32>
    %cst_41 = arith.constant dense<0.000000e+00> : vector<8x8xf32>
    %73 = tpu.matmul %72, %70, %cst_41 {dimension_numbers = #tpu.dot_dimension_numbers<[1], [0], [0], [1], [0, 0, 1, 1], [], []>} : vector<8x8xf32>, vector<8x8xf32>, vector<8x8xf32> -> vector<8x8xf32>
    %c0_42 = arith.constant 0 : index
    %c8 = arith.constant 8 : index
    %74 = vector.load %arg23[%c0_42, %c8] : memref<8x32xf32, #tpu.memory_space<vmem>>, vector<8x8xf32>
    tpu.vector_store %arg23[%c0_42, %c8], %73 {strides = array<i32>} : memref<8x32xf32, #tpu.memory_space<vmem>>, vector<8x8xf32>,
    %75 = vector.extract_strided_slice %15 {offsets = [0, 16], sizes = [8, 8], strides = [1, 1]} : vector<8x32xf32> to vector<8x8xf32>
    %76 = vector.extract_strided_slice %64 {offsets = [2, 0, 0], sizes = [1, 8, 8], strides = [1, 1, 1]} : vector<4x8x8xf32> to vector<1x8x8xf32>
    %77 = vector.shape_cast %76 : vector<1x8x8xf32> to vector<8x8xf32>
    %cst_43 = arith.constant dense<0.000000e+00> : vector<8x8xf32>
    %78 = tpu.matmul %77, %75, %cst_43 {dimension_numbers = #tpu.dot_dimension_numbers<[1], [0], [0], [1], [0, 0, 1, 1], [], []>} : vector<8x8xf32>, vector<8x8xf32>, vector<8x8xf32> -> vector<8x8xf32>
    %c0_44 = arith.constant 0 : index
    %c16 = arith.constant 16 : index
    %79 = vector.load %arg23[%c0_44, %c16] : memref<8x32xf32, #tpu.memory_space<vmem>>, vector<8x8xf32>
    tpu.vector_store %arg23[%c0_44, %c16], %78 {strides = array<i32>} : memref<8x32xf32, #tpu.memory_space<vmem>>, vector<8x8xf32>,
    %80 = vector.extract_strided_slice %15 {offsets = [0, 24], sizes = [8, 8], strides = [1, 1]} : vector<8x32xf32> to vector<8x8xf32>
    %81 = vector.extract_strided_slice %64 {offsets = [3, 0, 0], sizes = [1, 8, 8], strides = [1, 1, 1]} : vector<4x8x8xf32> to vector<1x8x8xf32>
    %82 = vector.shape_cast %81 : vector<1x8x8xf32> to vector<8x8xf32>
    %cst_45 = arith.constant dense<0.000000e+00> : vector<8x8xf32>
    %83 = tpu.matmul %82, %80, %cst_45 {dimension_numbers = #tpu.dot_dimension_numbers<[1], [0], [0], [1], [0, 0, 1, 1], [], []>} : vector<8x8xf32>, vector<8x8xf32>, vector<8x8xf32> -> vector<8x8xf32>
    %c0_46 = arith.constant 0 : index
    %c24 = arith.constant 24 : index
    %84 = vector.load %arg23[%c0_46, %c24] : memref<8x32xf32, #tpu.memory_space<vmem>>, vector<8x8xf32>
    tpu.vector_store %arg23[%c0_46, %c24], %83 {strides = array<i32>} : memref<8x32xf32, #tpu.memory_space<vmem>>, vector<8x8xf32>,
    %c0_47 = arith.constant 0 : index
    %c0_48 = arith.constant 0 : index
    %85 = vector.load %arg23[%c0_47, %c0_48] : memref<8x32xf32, #tpu.memory_space<vmem>>, vector<8x32xf32>
    %c0_49 = arith.constant 0 : index
    %c0_50 = arith.constant 0 : index
    %86 = vector.load %arg12[%c0_49, %c0_50] : memref<32x32xf32, #tpu.memory_space<vmem>>, vector<32x32xf32>
    %cst_51 = arith.constant dense<0.000000e+00> : vector<8x32xf32>
    %87 = tpu.matmul %85, %86, %cst_51 {dimension_numbers = #tpu.dot_dimension_numbers<[1], [0], [0], [1], [0, 0, 1, 1], [], []>} : vector<8x32xf32>, vector<32x32xf32>, vector<8x32xf32> -> vector<8x32xf32>
    %c0_52 = arith.constant 0 : index
    %c0_53 = arith.constant 0 : index
    %88 = vector.load %arg13[%c0_52, %c0_53] : memref<1x32xf32, #tpu.memory_space<vmem>>, vector<1x32xf32>
    %89 = vector.broadcast %88 : vector<1x32xf32> to vector<8x32xf32>
    %90 = arith.addf %87, %89 : vector<8x32xf32>
    %91 = arith.addf %21, %90 : vector<8x32xf32>
    %cst_54 = arith.constant dense<0.000000e+00> : vector<8xf32>
    %92 = vector.multi_reduction <add>, %91, %cst_54 [1] : vector<8x32xf32> to vector<8xf32>
    %93 = vector.shape_cast %92 : vector<8xf32> to vector<8x1xf32>
    %cst_55 = arith.constant 3.200000e+01 : f32
    %94 = vector.broadcast %cst_55 : f32 to vector<8x1xf32>
    %95 = arith.divf %93, %94 : vector<8x1xf32>
    %96 = vector.broadcast %95 : vector<8x1xf32> to vector<8x32xf32>
    %97 = arith.subf %91, %96 : vector<8x32xf32>
    %98 = arith.mulf %97, %97 : vector<8x32xf32>
    %cst_56 = arith.constant dense<0.000000e+00> : vector<8xf32>
    %99 = vector.multi_reduction <add>, %98, %cst_56 [1] : vector<8x32xf32> to vector<8xf32>
    %100 = vector.shape_cast %99 : vector<8xf32> to vector<8x1xf32>
    %cst_57 = arith.constant 3.200000e+01 : f32
    %101 = vector.broadcast %cst_57 : f32 to vector<8x1xf32>
    %102 = arith.divf %100, %101 : vector<8x1xf32>
    %103 = vector.broadcast %95 : vector<8x1xf32> to vector<8x32xf32>
    %104 = arith.subf %91, %103 : vector<8x32xf32>
    %cst_58 = arith.constant 9.99999974E-6 : f32
    %105 = vector.broadcast %cst_58 : f32 to vector<8x1xf32>
    %106 = arith.addf %102, %105 : vector<8x1xf32>
    %107 = math.rsqrt %106 : vector<8x1xf32>
    %108 = vector.broadcast %107 : vector<8x1xf32> to vector<8x32xf32>
    %109 = arith.mulf %104, %108 : vector<8x32xf32>
    %c0_59 = arith.constant 0 : index
    %c0_60 = arith.constant 0 : index
    %110 = vector.load %arg18[%c0_59, %c0_60] : memref<1x32xf32, #tpu.memory_space<vmem>>, vector<1x32xf32>
    %111 = vector.broadcast %110 : vector<1x32xf32> to vector<8x32xf32>
    %112 = arith.mulf %109, %111 : vector<8x32xf32>
    %c0_61 = arith.constant 0 : index
    %c0_62 = arith.constant 0 : index
    %113 = vector.load %arg19[%c0_61, %c0_62] : memref<1x32xf32, #tpu.memory_space<vmem>>, vector<1x32xf32>
    %114 = vector.broadcast %113 : vector<1x32xf32> to vector<8x32xf32>
    %115 = arith.addf %112, %114 : vector<8x32xf32>
    %c0_63 = arith.constant 0 : index
    %c0_64 = arith.constant 0 : index
    %116 = vector.load %arg14[%c0_63, %c0_64] : memref<32x64xf32, #tpu.memory_space<vmem>>, vector<32x64xf32>
    %cst_65 = arith.constant dense<0.000000e+00> : vector<8x64xf32>
    %117 = tpu.matmul %115, %116, %cst_65 {dimension_numbers = #tpu.dot_dimension_numbers<[1], [0], [0], [1], [0, 0, 1, 1], [], []>} : vector<8x32xf32>, vector<32x64xf32>, vector<8x64xf32> -> vector<8x64xf32>
    %c0_66 = arith.constant 0 : index
    %c0_67 = arith.constant 0 : index
    %118 = vector.load %arg15[%c0_66, %c0_67] : memref<1x64xf32, #tpu.memory_space<vmem>>, vector<1x64xf32>
    %119 = vector.broadcast %118 : vector<1x64xf32> to vector<8x64xf32>
    %120 = arith.addf %117, %119 : vector<8x64xf32>
    %cst_68 = arith.constant 0.000000e+00 : f32
    %121 = vector.broadcast %cst_68 : f32 to vector<8x64xf32>
    %122 = arith.maximumf %120, %121 : vector<8x64xf32>
    %c0_69 = arith.constant 0 : index
    %c0_70 = arith.constant 0 : index
    %123 = vector.load %arg16[%c0_69, %c0_70] : memref<64x32xf32, #tpu.memory_space<vmem>>, vector<64x32xf32>
    %cst_71 = arith.constant dense<0.000000e+00> : vector<8x32xf32>
    %124 = tpu.matmul %122, %123, %cst_71 {dimension_numbers = #tpu.dot_dimension_numbers<[1], [0], [0], [1], [0, 0, 1, 1], [], []>} : vector<8x64xf32>, vector<64x32xf32>, vector<8x32xf32> -> vector<8x32xf32>
    %c0_72 = arith.constant 0 : index
    %c0_73 = arith.constant 0 : index
    %125 = vector.load %arg17[%c0_72, %c0_73] : memref<1x32xf32, #tpu.memory_space<vmem>>, vector<1x32xf32>
    %126 = vector.broadcast %125 : vector<1x32xf32> to vector<8x32xf32>
    %127 = arith.addf %124, %126 : vector<8x32xf32>
    %128 = arith.addf %115, %127 : vector<8x32xf32>
    %cst_74 = arith.constant dense<0.000000e+00> : vector<8xf32>
    %129 = vector.multi_reduction <add>, %128, %cst_74 [1] : vector<8x32xf32> to vector<8xf32>
    %130 = vector.shape_cast %129 : vector<8xf32> to vector<8x1xf32>
    %cst_75 = arith.constant 3.200000e+01 : f32
    %131 = vector.broadcast %cst_75 : f32 to vector<8x1xf32>
    %132 = arith.divf %130, %131 : vector<8x1xf32>
    %133 = vector.broadcast %132 : vector<8x1xf32> to vector<8x32xf32>
    %134 = arith.subf %128, %133 : vector<8x32xf32>
    %135 = arith.mulf %134, %134 : vector<8x32xf32>
    %cst_76 = arith.constant dense<0.000000e+00> : vector<8xf32>
    %136 = vector.multi_reduction <add>, %135, %cst_76 [1] : vector<8x32xf32> to vector<8xf32>
    %137 = vector.shape_cast %136 : vector<8xf32> to vector<8x1xf32>
    %cst_77 = arith.constant 3.200000e+01 : f32
    %138 = vector.broadcast %cst_77 : f32 to vector<8x1xf32>
    %139 = arith.divf %137, %138 : vector<8x1xf32>
    %140 = vector.broadcast %132 : vector<8x1xf32> to vector<8x32xf32>
    %141 = arith.subf %128, %140 : vector<8x32xf32>
    %cst_78 = arith.constant 9.99999974E-6 : f32
    %142 = vector.broadcast %cst_78 : f32 to vector<8x1xf32>
    %143 = arith.addf %139, %142 : vector<8x1xf32>
    %144 = math.rsqrt %143 : vector<8x1xf32>
    %145 = vector.broadcast %144 : vector<8x1xf32> to vector<8x32xf32>
    %146 = arith.mulf %141, %145 : vector<8x32xf32>
    %c0_79 = arith.constant 0 : index
    %c0_80 = arith.constant 0 : index
    %147 = vector.load %arg20[%c0_79, %c0_80] : memref<1x32xf32, #tpu.memory_space<vmem>>, vector<1x32xf32>
    %148 = vector.broadcast %147 : vector<1x32xf32> to vector<8x32xf32>
    %149 = arith.mulf %146, %148 : vector<8x32xf32>
    %c0_81 = arith.constant 0 : index
    %c0_82 = arith.constant 0 : index
    %150 = vector.load %arg21[%c0_81, %c0_82] : memref<1x32xf32, #tpu.memory_space<vmem>>, vector<1x32xf32>
    %151 = vector.broadcast %150 : vector<1x32xf32> to vector<8x32xf32>
    %152 = arith.addf %149, %151 : vector<8x32xf32>
    %c0_83 = arith.constant 0 : index
    %c0_84 = arith.constant 0 : index
    %153 = vector.load %arg22[%c0_83, %c0_84] : memref<8x32xf32, #tpu.memory_space<vmem>>, vector<8x32xf32>
    tpu.vector_store %arg22[%c0_83, %c0_84], %152 {strides = array<i32>} : memref<8x32xf32, #tpu.memory_space<vmem>>, vector<8x32xf32>,
    return
  }
  func.func @transform_0(%arg0: i32) -> (i32, i32) {
    %c0_i32 = arith.constant 0 : i32
    %c0_i32_0 = arith.constant 0 : i32
    %c0_i32_1 = arith.constant 0 : i32
    return %c0_i32, %c0_i32_0 : i32, i32
  }
  func.func @transform_1(%arg0: i32) -> (i32, i32) {
    %c0_i32 = arith.constant 0 : i32
    %c0_i32_0 = arith.constant 0 : i32
    return %arg0, %c0_i32 : i32, i32
  }
  func.func @transform_2(%arg0: i32) -> (i32, i32) {
    %c0_i32 = arith.constant 0 : i32
    %c0_i32_0 = arith.constant 0 : i32
    return %arg0, %c0_i32 : i32, i32
  }
  func.func @transform_3(%arg0: i32) -> (i32, i32) {
    %c0_i32 = arith.constant 0 : i32
    %c0_i32_0 = arith.constant 0 : i32
    %c0_i32_1 = arith.constant 0 : i32
    return %c0_i32, %c0_i32_0 : i32, i32
  }
  func.func @transform_4(%arg0: i32) -> (i32, i32) {
    %c0_i32 = arith.constant 0 : i32
    %c0_i32_0 = arith.constant 0 : i32
    %c0_i32_1 = arith.constant 0 : i32
    return %c0_i32, %c0_i32_0 : i32, i32
  }
  func.func @transform_5(%arg0: i32) -> (i32, i32) {
    %c0_i32 = arith.constant 0 : i32
    %c0_i32_0 = arith.constant 0 : i32
    %c0_i32_1 = arith.constant 0 : i32
    return %c0_i32, %c0_i32_0 : i32, i32
  }
  func.func @transform_6(%arg0: i32) -> (i32, i32) {
    %c0_i32 = arith.constant 0 : i32
    %c0_i32_0 = arith.constant 0 : i32
    %c0_i32_1 = arith.constant 0 : i32
    return %c0_i32, %c0_i32_0 : i32, i32
  }
  func.func @transform_7(%arg0: i32) -> (i32, i32) {
    %c0_i32 = arith.constant 0 : i32
    %c0_i32_0 = arith.constant 0 : i32
    %c0_i32_1 = arith.constant 0 : i32
    return %c0_i32, %c0_i32_0 : i32, i32
  }
  func.func @transform_8(%arg0: i32) -> (i32, i32) {
    %c0_i32 = arith.constant 0 : i32
    %c0_i32_0 = arith.constant 0 : i32
    %c0_i32_1 = arith.constant 0 : i32
    return %c0_i32, %c0_i32_0 : i32, i32
  }
  func.func @transform_9(%arg0: i32) -> (i32, i32) {
    %c0_i32 = arith.constant 0 : i32
    %c0_i32_0 = arith.constant 0 : i32
    %c0_i32_1 = arith.constant 0 : i32
    return %c0_i32, %c0_i32_0 : i32, i32
  }
  func.func @transform_10(%arg0: i32) -> (i32, i32) {
    %c0_i32 = arith.constant 0 : i32
    %c0_i32_0 = arith.constant 0 : i32
    %c0_i32_1 = arith.constant 0 : i32
    return %c0_i32, %c0_i32_0 : i32, i32
  }
  func.func @transform_11(%arg0: i32) -> (i32, i32) {
    %c0_i32 = arith.constant 0 : i32
    %c0_i32_0 = arith.constant 0 : i32
    %c0_i32_1 = arith.constant 0 : i32
    return %c0_i32, %c0_i32_0 : i32, i32
  }
  func.func @transform_12(%arg0: i32) -> (i32, i32) {
    %c0_i32 = arith.constant 0 : i32
    %c0_i32_0 = arith.constant 0 : i32
    %c0_i32_1 = arith.constant 0 : i32
    return %c0_i32, %c0_i32_0 : i32, i32
  }
  func.func @transform_13(%arg0: i32) -> (i32, i32) {
    %c0_i32 = arith.constant 0 : i32
    %c0_i32_0 = arith.constant 0 : i32
    %c0_i32_1 = arith.constant 0 : i32
    return %c0_i32, %c0_i32_0 : i32, i32
  }
  func.func @transform_14(%arg0: i32) -> (i32, i32) {
    %c0_i32 = arith.constant 0 : i32
    %c0_i32_0 = arith.constant 0 : i32
    %c0_i32_1 = arith.constant 0 : i32
    return %c0_i32, %c0_i32_0 : i32, i32
  }
  func.func @transform_15(%arg0: i32) -> (i32, i32) {
    %c0_i32 = arith.constant 0 : i32
    %c0_i32_0 = arith.constant 0 : i32
    %c0_i32_1 = arith.constant 0 : i32
    return %c0_i32, %c0_i32_0 : i32, i32
  }
  func.func @transform_16(%arg0: i32) -> (i32, i32) {
    %c0_i32 = arith.constant 0 : i32
    %c0_i32_0 = arith.constant 0 : i32
    %c0_i32_1 = arith.constant 0 : i32
    return %c0_i32, %c0_i32_0 : i32, i32
  }
  func.func @transform_17(%arg0: i32) -> (i32, i32) {
    %c0_i32 = arith.constant 0 : i32
    %c0_i32_0 = arith.constant 0 : i32
    %c0_i32_1 = arith.constant 0 : i32
    return %c0_i32, %c0_i32_0 : i32, i32
  }
  func.func @transform_18(%arg0: i32) -> (i32, i32) {
    %c0_i32 = arith.constant 0 : i32
    %c0_i32_0 = arith.constant 0 : i32
    %c0_i32_1 = arith.constant 0 : i32
    return %c0_i32, %c0_i32_0 : i32, i32
  }
  func.func @transform_19(%arg0: i32) -> (i32, i32) {
    %c0_i32 = arith.constant 0 : i32
    %c0_i32_0 = arith.constant 0 : i32
    %c0_i32_1 = arith.constant 0 : i32
    return %c0_i32, %c0_i32_0 : i32, i32
  }
  func.func @transform_20(%arg0: i32) -> (i32, i32) {
    %c0_i32 = arith.constant 0 : i32
    %c0_i32_0 = arith.constant 0 : i32
    %c0_i32_1 = arith.constant 0 : i32
    return %c0_i32, %c0_i32_0 : i32, i32
  }
  func.func @transform_21(%arg0: i32) -> (i32, i32) {
    %c0_i32 = arith.constant 0 : i32
    %c0_i32_0 = arith.constant 0 : i32
    return %arg0, %c0_i32 : i32, i32
  }
}

</mosaic_0001>

<llo_original>
// kernel: tpu_custom_call.1
$region0: #{tpu_custom_call.1}
  #allocation0 [shape = 'u32[]', space=smem, size = 0x4, offset = 0x4, fixed_abs, tag = 'smem constant byte address 0x4 - core index']
  #allocation1 [shape = 'u32[144,128]{1,0:T(1,128)}', space=vmem, size = 0x12000, scoped, tag = 'internal scratch']
  #allocation2 [shape = 'f32[8,32]{1,0:T(8,128)}', space=vmem, size = 0x1000, scoped, tag = 'scratch operand']
  %s0 = inlined_call_operand.hbm [shape: f32[8,16], index: 0, kind: input, shape index: {}]
  %s1 = inlined_call_operand.hbm [shape: f32[8,16], index: 1, kind: input, shape index: {}]
  %s2 = inlined_call_operand.hbm [shape: bf16[8,8], index: 2, kind: input, shape index: {}]
  %s3 = inlined_call_operand.hbm [shape: f32[16,32], index: 3, kind: input, shape index: {}]
  %s4 = inlined_call_operand.vmem [shape: f32[1,32], index: 4, kind: input, shape index: {}]
  %s5 = inlined_call_operand.vmem [shape: f32[32,32], index: 5, kind: input, shape index: {}]
  %s6 = inlined_call_operand.vmem [shape: f32[1,32], index: 6, kind: input, shape index: {}]
  %s7 = inlined_call_operand.vmem [shape: f32[32,32], index: 7, kind: input, shape index: {}]
  %s8 = inlined_call_operand.vmem [shape: f32[1,32], index: 8, kind: input, shape index: {}]
  %s9 = inlined_call_operand.vmem [shape: f32[32,32], index: 9, kind: input, shape index: {}]
  %s10 = inlined_call_operand.vmem [shape: f32[1,32], index: 10, kind: input, shape index: {}]
  %s11 = inlined_call_operand.hbm [shape: f32[32,32], index: 11, kind: input, shape index: {}]
  %s12 = inlined_call_operand.vmem [shape: f32[1,32], index: 12, kind: input, shape index: {}]
  %s13 = inlined_call_operand.hbm [shape: f32[32,64], index: 13, kind: input, shape index: {}]
  %s14 = inlined_call_operand.vmem [shape: f32[1,64], index: 14, kind: input, shape index: {}]
  %s15 = inlined_call_operand.vmem [shape: f32[64,32], index: 15, kind: input, shape index: {}]
  %s16 = inlined_call_operand.vmem [shape: f32[1,32], index: 16, kind: input, shape index: {}]
  %s17 = inlined_call_operand.vmem [shape: f32[1,32], index: 17, kind: input, shape index: {}]
  %s18 = inlined_call_operand.vmem [shape: f32[1,32], index: 18, kind: input, shape index: {}]
  %s19 = inlined_call_operand.vmem [shape: f32[1,32], index: 19, kind: input, shape index: {}]
  %s20 = inlined_call_operand.vmem [shape: f32[1,32], index: 20, kind: input, shape index: {}]
  %s21 = inlined_call_operand.hbm [shape: f32[8,32], index: 21, kind: output, shape index: {}]
  %s22 = sld [smem:[#allocation0]]
  $region118: #{tpu_custom_call.1} parent=0
    _
  %s24 = ssub.s32 1, %s22
  %s25 = scalar_select 0, %s24, %s22
  $region1: #{tpu_custom_call.1} parent=0
    #allocation3 [shape = 'u8[4096]{0}', space=vmem, size = 0x1000, scoped, tag = 'input window, operand 0, single buffered']
    #allocation4 [shape = 's32[1]{0}', space=sflag, size = 0x4, scoped, tag = 'scoped memory for tpu_custom_call.1']
    #allocation5 [shape = 's32[1]{0}', space=sflag, size = 0x4, scoped, tag = 'scoped memory for tpu_custom_call.1']
    #allocation6 [shape = 'u8[4096]{0}', space=vmem, size = 0x1000, scoped, tag = 'input window, operand 1, single buffered']
    #allocation7 [shape = 's32[1]{0}', space=sflag, size = 0x4, scoped, tag = 'scoped memory for tpu_custom_call.1']
    #allocation8 [shape = 'u8[2048]{0}', space=vmem, size = 0x800, scoped, tag = 'input window, operand 2, single buffered']
    #allocation9 [shape = 'u8[8192]{0}', space=vmem, size = 0x2000, scoped, tag = 'input window, operand 3, single buffered']
    #allocation10 [shape = 's32[1]{0}', space=sflag, size = 0x4, scoped, tag = 'scoped memory for tpu_custom_call.1']
    #allocation11 [shape = 'u8[16384]{0}', space=vmem, size = 0x4000, scoped, tag = 'input window, operand 11, single buffered']
    #allocation12 [shape = 'u8[16384]{0}', space=vmem, size = 0x4000, scoped, tag = 'input window, operand 13, single buffered']
    #allocation13 [shape = 's32[1]{0}', space=sflag, size = 0x4, scoped, tag = 'scoped memory for tpu_custom_call.1']
    #allocation14 [shape = 'u8[4096]{0}', space=vmem, size = 0x1000, scoped, tag = 'output window, operand 0, single buffered']
    %26 = vsyncpa [#allocation4], 0
    %27 = vsyncpa [#allocation7], 0
    %28 = vsyncpa [#allocation10], 0
    %29 = vsyncpa [#allocation13], 0
    %30 = vsyncpa [#allocation5], 0
    // Predicated region
    $region2: #{tpu_custom_call.1} parent=1 // pred_check
      _
    $region3: #{tpu_custom_call.1} parent=1 // pred_check_branch
      %32 = sbr.rel (0) target = $region5
    $region4: #{tpu_custom_call.1} parent=1 // pred_region
      %s34 = ssub.s32 128, 128
      %35 = vsyncadd [#allocation4], %s34
      %s37 = sshll.u32 [#allocation3], 4
      %s38 = int_to_ptr.vmem [resolvable:$true] %s37
      %40 = dma.hbm_to_vmem [thread:$0]  %s0, 128, %s38, [#allocation4]
    $region5: #{tpu_custom_call.1} parent=1 // pred_fallthru
      _
    // Predicated region
    $region6: #{tpu_custom_call.1} parent=1 // pred_check
      _
    $region7: #{tpu_custom_call.1} parent=1 // pred_check_branch
      %42 = sbr.rel (0) target = $region9
    $region8: #{tpu_custom_call.1} parent=1 // pred_region
      %s44 = ssub.s32 128, 128
      %45 = vsyncadd [#allocation7], %s44
      %s47 = sshll.u32 [#allocation6], 4
      %s48 = int_to_ptr.vmem [resolvable:$true] %s47
      %50 = dma.hbm_to_vmem [thread:$0]  %s1, 128, %s48, [#allocation7]
    $region9: #{tpu_custom_call.1} parent=1 // pred_fallthru
      _
    // Predicated region
    $region10: #{tpu_custom_call.1} parent=1 // pred_check
      _
    $region11: #{tpu_custom_call.1} parent=1 // pred_check_branch
      %52 = sbr.rel (0) target = $region13
    $region12: #{tpu_custom_call.1} parent=1 // pred_region
      %s54 = ssub.s32 64, 64
      %55 = vsyncadd [#allocation7], %s54
      %s57 = sshll.u32 [#allocation8], 4
      %s58 = int_to_ptr.vmem [resolvable:$true] %s57
      %60 = dma.hbm_to_vmem [thread:$0]  %s2, 64, %s58, [#allocation7]
    $region13: #{tpu_custom_call.1} parent=1 // pred_fallthru
      _
    // Predicated region
    $region14: #{tpu_custom_call.1} parent=1 // pred_check
      _
    $region15: #{tpu_custom_call.1} parent=1 // pred_check_branch
      %62 = sbr.rel (0) target = $region17
    $region16: #{tpu_custom_call.1} parent=1 // pred_region
      %s64 = ssub.s32 256, 256
      %65 = vsyncadd [#allocation10], %s64
      %s66 = sshll.u32 [#allocation9], 4
      %s67 = int_to_ptr.vmem [resolvable:$true] %s66
      %72 = dma.hbm_to_vmem [thread:$0]  %s3, 256, %s67, [#allocation10], 128, 128, 8
    $region17: #{tpu_custom_call.1} parent=1 // pred_fallthru
      _
    // Predicated region
    $region18: #{tpu_custom_call.1} parent=1 // pred_check
      _
    $region19: #{tpu_custom_call.1} parent=1 // pred_check_branch
      %74 = sbr.rel (0) target = $region21
    $region20: #{tpu_custom_call.1} parent=1 // pred_region
      _
    $region21: #{tpu_custom_call.1} parent=1 // pred_fallthru
      _
    // Predicated region
    $region22: #{tpu_custom_call.1} parent=1 // pred_check
      _
    $region23: #{tpu_custom_call.1} parent=1 // pred_check_branch
      %76 = sbr.rel (0) target = $region25
    $region24: #{tpu_custom_call.1} parent=1 // pred_region
      _
    $region25: #{tpu_custom_call.1} parent=1 // pred_fallthru
      _
    // Predicated region
    $region26: #{tpu_custom_call.1} parent=1 // pred_check
      _
    $region27: #{tpu_custom_call.1} parent=1 // pred_check_branch
      %78 = sbr.rel (0) target = $region29
    $region28: #{tpu_custom_call.1} parent=1 // pred_region
      _
    $region29: #{tpu_custom_call.1} parent=1 // pred_fallthru
      _
    // Predicated region
    $region30: #{tpu_custom_call.1} parent=1 // pred_check
      _
    $region31: #{tpu_custom_call.1} parent=1 // pred_check_branch
      %80 = sbr.rel (0) target = $region33
    $region32: #{tpu_custom_call.1} parent=1 // pred_region
      _
    $region33: #{tpu_custom_call.1} parent=1 // pred_fallthru
      _
    // Predicated region
    $region34: #{tpu_custom_call.1} parent=1 // pred_check
      _
    $region35: #{tpu_custom_call.1} parent=1 // pred_check_branch
      %82 = sbr.rel (0) target = $region37
    $region36: #{tpu_custom_call.1} parent=1 // pred_region
      _
    $region37: #{tpu_custom_call.1} parent=1 // pred_fallthru
      _
    // Predicated region
    $region38: #{tpu_custom_call.1} parent=1 // pred_check
      _
    $region39: #{tpu_custom_call.1} parent=1 // pred_check_branch
      %84 = sbr.rel (0) target = $region41
    $region40: #{tpu_custom_call.1} parent=1 // pred_region
      _
    $region41: #{tpu_custom_call.1} parent=1 // pred_fallthru
      _
    // Predicated region
    $region42: #{tpu_custom_call.1} parent=1 // pred_check
      _
    $region43: #{tpu_custom_call.1} parent=1 // pred_check_branch
      %86 = sbr.rel (0) target = $region45
    $region44: #{tpu_custom_call.1} parent=1 // pred_region
      _
    $region45: #{tpu_custom_call.1} parent=1 // pred_fallthru
      _
    // Predicated region
    $region46: #{tpu_custom_call.1} parent=1 // pred_check
      _
    $region47: #{tpu_custom_call.1} parent=1 // pred_check_branch
      %88 = sbr.rel (0) target = $region49
    $region48: #{tpu_custom_call.1} parent=1 // pred_region
      %s90 = ssub.s32 512, 512
      %91 = vsyncadd [#allocation10], %s90
      %s92 = sshll.u32 [#allocation11], 4
      %s93 = int_to_ptr.vmem [resolvable:$true] %s92
      %98 = dma.hbm_to_vmem [thread:$0]  %s11, 512, %s93, [#allocation10], 128, 128, 8
    $region49: #{tpu_custom_call.1} parent=1 // pred_fallthru
      _
    // Predicated region
    $region50: #{tpu_custom_call.1} parent=1 // pred_check
      _
    $region51: #{tpu_custom_call.1} parent=1 // pred_check_branch
      %100 = sbr.rel (0) target = $region53
    $region52: #{tpu_custom_call.1} parent=1 // pred_region
      _
    $region53: #{tpu_custom_call.1} parent=1 // pred_fallthru
      _
    // Predicated region
    $region54: #{tpu_custom_call.1} parent=1 // pred_check
      _
    $region55: #{tpu_custom_call.1} parent=1 // pred_check_branch
      %102 = sbr.rel (0) target = $region57
    $region56: #{tpu_custom_call.1} parent=1 // pred_region
      %s104 = ssub.s32 512, 512
      %105 = vsyncadd [#allocation13], %s104
      %s106 = sshll.u32 [#allocation12], 4
      %s107 = int_to_ptr.vmem [resolvable:$true] %s106
      %112 = dma.hbm_to_vmem [thread:$0]  %s13, 512, %s107, [#allocation13], 128, 128, 8
    $region57: #{tpu_custom_call.1} parent=1 // pred_fallthru
      _
    // Predicated region
    $region58: #{tpu_custom_call.1} parent=1 // pred_check
      _
    $region59: #{tpu_custom_call.1} parent=1 // pred_check_branch
      %114 = sbr.rel (0) target = $region61
    $region60: #{tpu_custom_call.1} parent=1 // pred_region
      _
    $region61: #{tpu_custom_call.1} parent=1 // pred_fallthru
      _
    // Predicated region
    $region62: #{tpu_custom_call.1} parent=1 // pred_check
      _
    $region63: #{tpu_custom_call.1} parent=1 // pred_check_branch
      %116 = sbr.rel (0) target = $region65
    $region64: #{tpu_custom_call.1} parent=1 // pred_region
      _
    $region65: #{tpu_custom_call.1} parent=1 // pred_fallthru
      _
    // Predicated region
    $region66: #{tpu_custom_call.1} parent=1 // pred_check
      _
    $region67: #{tpu_custom_call.1} parent=1 // pred_check_branch
      %118 = sbr.rel (0) target = $region69
    $region68: #{tpu_custom_call.1} parent=1 // pred_region
      _
    $region69: #{tpu_custom_call.1} parent=1 // pred_fallthru
      _
    // Predicated region
    $region70: #{tpu_custom_call.1} parent=1 // pred_check
      _
    $region71: #{tpu_custom_call.1} parent=1 // pred_check_branch
      %120 = sbr.rel (0) target = $region73
    $region72: #{tpu_custom_call.1} parent=1 // pred_region
      _
    $region73: #{tpu_custom_call.1} parent=1 // pred_fallthru
      _
    // Predicated region
    $region74: #{tpu_custom_call.1} parent=1 // pred_check
      _
    $region75: #{tpu_custom_call.1} parent=1 // pred_check_branch
      %122 = sbr.rel (0) target = $region77
    $region76: #{tpu_custom_call.1} parent=1 // pred_region
      _
    $region77: #{tpu_custom_call.1} parent=1 // pred_fallthru
      _
    // Predicated region
    $region78: #{tpu_custom_call.1} parent=1 // pred_check
      _
    $region79: #{tpu_custom_call.1} parent=1 // pred_check_branch
      %124 = sbr.rel (0) target = $region81
    $region80: #{tpu_custom_call.1} parent=1 // pred_region
      _
    $region81: #{tpu_custom_call.1} parent=1 // pred_fallthru
      _
    // Predicated region
    $region82: #{tpu_custom_call.1} parent=1 // pred_check
      _
    $region83: #{tpu_custom_call.1} parent=1 // pred_check_branch
      %126 = sbr.rel (0) target = $region85
    $region84: #{tpu_custom_call.1} parent=1 // pred_region
      _
    $region85: #{tpu_custom_call.1} parent=1 // pred_fallthru
      _
    // Predicated region
    $region86: #{tpu_custom_call.1} parent=1 // pred_check
      _
    $region87: #{tpu_custom_call.1} parent=1 // pred_check_branch
      %128 = sbr.rel (0) target = $region89
    $region88: #{tpu_custom_call.1} parent=1 // pred_region
      %129 = dma.done [#allocation4], 128
    $region89: #{tpu_custom_call.1} parent=1 // pred_fallthru
      _
    // Predicated region
    $region90: #{tpu_custom_call.1} parent=1 // pred_check
      _
    $region91: #{tpu_custom_call.1} parent=1 // pred_check_branch
      %131 = sbr.rel (0) target = $region93
    $region92: #{tpu_custom_call.1} parent=1 // pred_region
      %132 = dma.done [#allocation7], 128
    $region93: #{tpu_custom_call.1} parent=1 // pred_fallthru
      _
    // Predicated region
    $region94: #{tpu_custom_call.1} parent=1 // pred_check
      _
    $region95: #{tpu_custom_call.1} parent=1 // pred_check_branch
      %134 = sbr.rel (0) target = $region97
    $region96: #{tpu_custom_call.1} parent=1 // pred_region
      %135 = dma.done [#allocation7], 64
    $region97: #{tpu_custom_call.1} parent=1 // pred_fallthru
      _
    // Predicated region
    $region98: #{tpu_custom_call.1} parent=1 // pred_check
      _
    $region99: #{tpu_custom_call.1} parent=1 // pred_check_branch
      %137 = sbr.rel (0) target = $region101
    $region100: #{tpu_custom_call.1} parent=1 // pred_region
      %138 = dma.done [#allocation10], 256
    $region101: #{tpu_custom_call.1} parent=1 // pred_fallthru
      _
    // Predicated region
    $region102: #{tpu_custom_call.1} parent=1 // pred_check
      _
    $region103: #{tpu_custom_call.1} parent=1 // pred_check_branch
      %140 = sbr.rel (0) target = $region105
    $region104: #{tpu_custom_call.1} parent=1 // pred_region
      %141 = dma.done [#allocation10], 512
    $region105: #{tpu_custom_call.1} parent=1 // pred_fallthru
      _
    // Predicated region
    $region106: #{tpu_custom_call.1} parent=1 // pred_check
      _
    $region107: #{tpu_custom_call.1} parent=1 // pred_check_branch
      %143 = sbr.rel (0) target = $region109
    $region108: #{tpu_custom_call.1} parent=1 // pred_region
      %144 = dma.done [#allocation13], 512
    $region109: #{tpu_custom_call.1} parent=1 // pred_fallthru
      _
    %v145 = vld [vmem:[#allocation3] sm:$0xff]
    %v146 = vld [vmem:[#allocation9] sm:$0xff]
    %v147 = vld [vmem:[#allocation9 + $0x8] sm:$0xff]
    %v148 = vld [vmem:[%s4] sm:$0x1]
    %v150 = vlaneseq
    %v151 = vshrl.u32 %v150, 7
    %v152 = vsub.s32 0, %v151
    %v153 = vrot.slane %v148, %v152
    %vm155 = vcmask 130048
    %v157 = vsel %vm155, %v145, 0
    %159 = vmatprep.subr.mxu0 0.0
    %160 = vmatpush1.msra.mxu0 0.0
    %161 = vmatprep.subr.mxu0 0.0
    %162 = vmatpush1.msra.mxu0 0.0
    %163 = vmatprep.subr.mxu0 0.0
    %164 = vmatpush1.msra.mxu0 0.0
    %165 = vmatprep.subr.mxu0 0.0
    %166 = vmatpush1.msra.mxu0 0.0
    %167 = vmatprep.subr.mxu0 0.0
    %168 = vmatpush1.msra.mxu0 0.0
    %169 = vmatprep.subr.mxu0 0.0
    %170 = vmatpush1.msra.mxu0 0.0
    %171 = vmatprep.subr.mxu0 0.0
    %172 = vmatpush1.msra.mxu0 0.0
    %173 = vmatprep.subr.mxu0 0.0
    %174 = vmatpush1.msra.mxu0 0.0
    %175 = vmatprep.subr.mxu0 0.0
    %176 = vmatpush1.msra.mxu0 0.0
    %177 = vmatprep.subr.mxu0 0.0
    %178 = vmatpush1.msra.mxu0 0.0
    %179 = vmatprep.subr.mxu0 0.0
    %180 = vmatpush1.msra.mxu0 0.0
    %181 = vmatprep.subr.mxu0 0.0
    %182 = vmatpush1.msra.mxu0 0.0
    %183 = vmatprep.subr.mxu0 0.0
    %184 = vmatpush1.msra.mxu0 0.0
    %185 = vmatprep.subr.mxu0 0.0
    %186 = vmatpush1.msra.mxu0 0.0
    %187 = vmatprep.subr.mxu0 0.0
    %188 = vmatpush1.msra.mxu0 %v147
    %189 = vmatprep.subr.mxu0 0.0
    %190 = vmatpush1.msra.mxu0 %v146
    %191 = vmatprep.subr.mxu0 0.0
    %192 = vmatpush2.msra.mxu0 0.0
    %193 = vmatprep.subr.mxu0 0.0
    %194 = vmatpush2.msra.mxu0 0.0
    %195 = vmatprep.subr.mxu0 0.0
    %196 = vmatpush2.msra.mxu0 0.0
    %197 = vmatprep.subr.mxu0 0.0
    %198 = vmatpush2.msra.mxu0 0.0
    %199 = vmatprep.subr.mxu0 0.0
    %200 = vmatpush2.msra.mxu0 0.0
    %201 = vmatprep.subr.mxu0 0.0
    %202 = vmatpush2.msra.mxu0 0.0
    %203 = vmatprep.subr.mxu0 0.0
    %204 = vmatpush2.msra.mxu0 0.0
    %205 = vmatprep.subr.mxu0 0.0
    %206 = vmatpush2.msra.mxu0 0.0
    %207 = vmatprep.subr.mxu0 0.0
    %208 = vmatpush2.msra.mxu0 0.0
    %209 = vmatprep.subr.mxu0 0.0
    %210 = vmatpush2.msra.mxu0 0.0
    %211 = vmatprep.subr.mxu0 0.0
    %212 = vmatpush2.msra.mxu0 0.0
    %213 = vmatprep.subr.mxu0 0.0
    %214 = vmatpush2.msra.mxu0 0.0
    %215 = vmatprep.subr.mxu0 0.0
    %216 = vmatpush2.msra.mxu0 0.0
    %217 = vmatprep.subr.mxu0 0.0
    %218 = vmatpush2.msra.mxu0 0.0
    %219 = vmatprep.subr.mxu0 0.0
    %220 = vmatpush2.msra.mxu0 0.0
    %221 = vmatprep.subr.mxu0 0.0
    %222 = vmatpush2.msra.mxu0 0.0
    %223 = vmatprep.mubr.f32.mxu0 0.0
    %224 = vmatmul.mubr.f32.gmra.mxu0 %v157
    %v225 = vpop.f32.mrf.mxu0
    %v226 = vadd.f32 %v153, %v225
    %v227 = vpop.f32.mrf.mxu0
    %228 = vdwg.mxu0
    %v229 = vld [vmem:[%s7] sm:$0xff]
    %v230 = vld [vmem:[%s7 + $0x8] sm:$0xff]
    %v231 = vld [vmem:[%s7 + $0x10] sm:$0xff]
    %v232 = vld [vmem:[%s7 + $0x18] sm:$0xff]
    %v233 = vld [vmem:[%s8] sm:$0x1]
    %v235 = vlaneseq
    %v236 = vshrl.u32 %v235, 7
    %v237 = vsub.s32 0, %v236
    %v238 = vrot.slane %v233, %v237
    %vm240 = vcmask 261120
    %v242 = vsel %vm240, %v226, 0
    %244 = vmatprep.subr.mxu0 0.0
    %245 = vmatpush1.msra.mxu0 0.0
    %246 = vmatprep.subr.mxu0 0.0
    %247 = vmatpush1.msra.mxu0 0.0
    %248 = vmatprep.subr.mxu0 0.0
    %249 = vmatpush1.msra.mxu0 0.0
    %250 = vmatprep.subr.mxu0 0.0
    %251 = vmatpush1.msra.mxu0 0.0
    %252 = vmatprep.subr.mxu0 0.0
    %253 = vmatpush1.msra.mxu0 0.0
    %254 = vmatprep.subr.mxu0 0.0
    %255 = vmatpush1.msra.mxu0 0.0
    %256 = vmatprep.subr.mxu0 0.0
    %257 = vmatpush1.msra.mxu0 0.0
    %258 = vmatprep.subr.mxu0 0.0
    %259 = vmatpush1.msra.mxu0 0.0
    %260 = vmatprep.subr.mxu0 0.0
    %261 = vmatpush1.msra.mxu0 0.0
    %262 = vmatprep.subr.mxu0 0.0
    %263 = vmatpush1.msra.mxu0 0.0
    %264 = vmatprep.subr.mxu0 0.0
    %265 = vmatpush1.msra.mxu0 0.0
    %266 = vmatprep.subr.mxu0 0.0
    %267 = vmatpush1.msra.mxu0 0.0
    %268 = vmatprep.subr.mxu0 0.0
    %269 = vmatpush1.msra.mxu0 %v232
    %270 = vmatprep.subr.mxu0 0.0
    %271 = vmatpush1.msra.mxu0 %v231
    %272 = vmatprep.subr.mxu0 0.0
    %273 = vmatpush1.msra.mxu0 %v230
    %274 = vmatprep.subr.mxu0 0.0
    %275 = vmatpush1.msra.mxu0 %v229
    %276 = vmatprep.subr.mxu0 0.0
    %277 = vmatpush2.msra.mxu0 0.0
    %278 = vmatprep.subr.mxu0 0.0
    %279 = vmatpush2.msra.mxu0 0.0
    %280 = vmatprep.subr.mxu0 0.0
    %281 = vmatpush2.msra.mxu0 0.0
    %282 = vmatprep.subr.mxu0 0.0
    %283 = vmatpush2.msra.mxu0 0.0
    %284 = vmatprep.subr.mxu0 0.0
    %285 = vmatpush2.msra.mxu0 0.0
    %286 = vmatprep.subr.mxu0 0.0
    %287 = vmatpush2.msra.mxu0 0.0
    %288 = vmatprep.subr.mxu0 0.0
    %289 = vmatpush2.msra.mxu0 0.0
    %290 = vmatprep.subr.mxu0 0.0
    %291 = vmatpush2.msra.mxu0 0.0
    %292 = vmatprep.subr.mxu0 0.0
    %293 = vmatpush2.msra.mxu0 0.0
    %294 = vmatprep.subr.mxu0 0.0
    %295 = vmatpush2.msra.mxu0 0.0
    %296 = vmatprep.subr.mxu0 0.0
    %297 = vmatpush2.msra.mxu0 0.0
    %298 = vmatprep.subr.mxu0 0.0
    %299 = vmatpush2.msra.mxu0 0.0
    %300 = vmatprep.subr.mxu0 0.0
    %301 = vmatpush2.msra.mxu0 0.0
    %302 = vmatprep.subr.mxu0 0.0
    %303 = vmatpush2.msra.mxu0 0.0
    %304 = vmatprep.subr.mxu0 0.0
    %305 = vmatpush2.msra.mxu0 0.0
    %306 = vmatprep.subr.mxu0 0.0
    %307 = vmatpush2.msra.mxu0 0.0
    %308 = vmatprep.mubr.f32.mxu0 0.0
    %309 = vmatmul.mubr.f32.gmra.mxu0 %v242
    %v310 = vpop.f32.mrf.mxu0
    %v311 = vadd.f32 %v238, %v310
    %v312 = vpop.f32.mrf.mxu0
    %313 = vdwg.mxu0
    %v314 = vld [vmem:[%s9] sm:$0xff]
    %v315 = vld [vmem:[%s9 + $0x8] sm:$0xff]
    %v316 = vld [vmem:[%s9 + $0x10] sm:$0xff]
    %v317 = vld [vmem:[%s9 + $0x18] sm:$0xff]
    %v318 = vld [vmem:[%s10] sm:$0x1]
    %v320 = vlaneseq
    %v321 = vshrl.u32 %v320, 7
    %v322 = vsub.s32 0, %v321
    %v323 = vrot.slane %v318, %v322
    %325 = vmatprep.subr.mxu0 0.0
    %326 = vmatpush1.msra.mxu0 0.0
    %327 = vmatprep.subr.mxu0 0.0
    %328 = vmatpush1.msra.mxu0 0.0
    %329 = vmatprep.subr.mxu0 0.0
    %330 = vmatpush1.msra.mxu0 0.0
    %331 = vmatprep.subr.mxu0 0.0
    %332 = vmatpush1.msra.mxu0 0.0
    %333 = vmatprep.subr.mxu0 0.0
    %334 = vmatpush1.msra.mxu0 0.0
    %335 = vmatprep.subr.mxu0 0.0
    %336 = vmatpush1.msra.mxu0 0.0
    %337 = vmatprep.subr.mxu0 0.0
    %338 = vmatpush1.msra.mxu0 0.0
    %339 = vmatprep.subr.mxu0 0.0
    %340 = vmatpush1.msra.mxu0 0.0
    %341 = vmatprep.subr.mxu0 0.0
    %342 = vmatpush1.msra.mxu0 0.0
    %343 = vmatprep.subr.mxu0 0.0
    %344 = vmatpush1.msra.mxu0 0.0
    %345 = vmatprep.subr.mxu0 0.0
    %346 = vmatpush1.msra.mxu0 0.0
    %347 = vmatprep.subr.mxu0 0.0
    %348 = vmatpush1.msra.mxu0 0.0
    %349 = vmatprep.subr.mxu0 0.0
    %350 = vmatpush1.msra.mxu0 %v317
    %351 = vmatprep.subr.mxu0 0.0
    %352 = vmatpush1.msra.mxu0 %v316
    %353 = vmatprep.subr.mxu0 0.0
    %354 = vmatpush1.msra.mxu0 %v315
    %355 = vmatprep.subr.mxu0 0.0
    %356 = vmatpush1.msra.mxu0 %v314
    %357 = vmatprep.subr.mxu0 0.0
    %358 = vmatpush2.msra.mxu0 0.0
    %359 = vmatprep.subr.mxu0 0.0
    %360 = vmatpush2.msra.mxu0 0.0
    %361 = vmatprep.subr.mxu0 0.0
    %362 = vmatpush2.msra.mxu0 0.0
    %363 = vmatprep.subr.mxu0 0.0
    %364 = vmatpush2.msra.mxu0 0.0
    %365 = vmatprep.subr.mxu0 0.0
    %366 = vmatpush2.msra.mxu0 0.0
    %367 = vmatprep.subr.mxu0 0.0
    %368 = vmatpush2.msra.mxu0 0.0
    %369 = vmatprep.subr.mxu0 0.0
    %370 = vmatpush2.msra.mxu0 0.0
    %371 = vmatprep.subr.mxu0 0.0
    %372 = vmatpush2.msra.mxu0 0.0
    %373 = vmatprep.subr.mxu0 0.0
    %374 = vmatpush2.msra.mxu0 0.0
    %375 = vmatprep.subr.mxu0 0.0
    %376 = vmatpush2.msra.mxu0 0.0
    %377 = vmatprep.subr.mxu0 0.0
    %378 = vmatpush2.msra.mxu0 0.0
    %379 = vmatprep.subr.mxu0 0.0
    %380 = vmatpush2.msra.mxu0 0.0
    %381 = vmatprep.subr.mxu0 0.0
    %382 = vmatpush2.msra.mxu0 0.0
    %383 = vmatprep.subr.mxu0 0.0
    %384 = vmatpush2.msra.mxu0 0.0
    %385 = vmatprep.subr.mxu0 0.0
    %386 = vmatpush2.msra.mxu0 0.0
    %387 = vmatprep.subr.mxu0 0.0
    %388 = vmatpush2.msra.mxu0 0.0
    %389 = vmatprep.mubr.f32.mxu0 0.0
    %390 = vmatmul.mubr.f32.gmra.mxu0 %v242
    %v391 = vpop.f32.mrf.mxu0
    %v392 = vadd.f32 %v323, %v391
    %v393 = vpop.f32.mrf.mxu0
    %394 = vdwg.mxu0
    %v395 = vld [vmem:[#allocation6] sm:$0xff]
    %v397 = vsel %vm155, %v395, 0
    %399 = vmatprep.subr.mxu0 0.0
    %400 = vmatpush1.msra.mxu0 0.0
    %401 = vmatprep.subr.mxu0 0.0
    %402 = vmatpush1.msra.mxu0 0.0
    %403 = vmatprep.subr.mxu0 0.0
    %404 = vmatpush1.msra.mxu0 0.0
    %405 = vmatprep.subr.mxu0 0.0
    %406 = vmatpush1.msra.mxu0 0.0
    %407 = vmatprep.subr.mxu0 0.0
    %408 = vmatpush1.msra.mxu0 0.0
    %409 = vmatprep.subr.mxu0 0.0
    %410 = vmatpush1.msra.mxu0 0.0
    %411 = vmatprep.subr.mxu0 0.0
    %412 = vmatpush1.msra.mxu0 0.0
    %413 = vmatprep.subr.mxu0 0.0
    %414 = vmatpush1.msra.mxu0 0.0
    %415 = vmatprep.subr.mxu0 0.0
    %416 = vmatpush1.msra.mxu0 0.0
    %417 = vmatprep.subr.mxu0 0.0
    %418 = vmatpush1.msra.mxu0 0.0
    %419 = vmatprep.subr.mxu0 0.0
    %420 = vmatpush1.msra.mxu0 0.0
    %421 = vmatprep.subr.mxu0 0.0
    %422 = vmatpush1.msra.mxu0 0.0
    %423 = vmatprep.subr.mxu0 0.0
    %424 = vmatpush1.msra.mxu0 0.0
    %425 = vmatprep.subr.mxu0 0.0
    %426 = vmatpush1.msra.mxu0 0.0
    %427 = vmatprep.subr.mxu0 0.0
    %428 = vmatpush1.msra.mxu0 %v147
    %429 = vmatprep.subr.mxu0 0.0
    %430 = vmatpush1.msra.mxu0 %v146
    %431 = vmatprep.subr.mxu0 0.0
    %432 = vmatpush2.msra.mxu0 0.0
    %433 = vmatprep.subr.mxu0 0.0
    %434 = vmatpush2.msra.mxu0 0.0
    %435 = vmatprep.subr.mxu0 0.0
    %436 = vmatpush2.msra.mxu0 0.0
    %437 = vmatprep.subr.mxu0 0.0
    %438 = vmatpush2.msra.mxu0 0.0
    %439 = vmatprep.subr.mxu0 0.0
    %440 = vmatpush2.msra.mxu0 0.0
    %441 = vmatprep.subr.mxu0 0.0
    %442 = vmatpush2.msra.mxu0 0.0
    %443 = vmatprep.subr.mxu0 0.0
    %444 = vmatpush2.msra.mxu0 0.0
    %445 = vmatprep.subr.mxu0 0.0
    %446 = vmatpush2.msra.mxu0 0.0
    %447 = vmatprep.subr.mxu0 0.0
    %448 = vmatpush2.msra.mxu0 0.0
    %449 = vmatprep.subr.mxu0 0.0
    %450 = vmatpush2.msra.mxu0 0.0
    %451 = vmatprep.subr.mxu0 0.0
    %452 = vmatpush2.msra.mxu0 0.0
    %453 = vmatprep.subr.mxu0 0.0
    %454 = vmatpush2.msra.mxu0 0.0
    %455 = vmatprep.subr.mxu0 0.0
    %456 = vmatpush2.msra.mxu0 0.0
    %457 = vmatprep.subr.mxu0 0.0
    %458 = vmatpush2.msra.mxu0 0.0
    %459 = vmatprep.subr.mxu0 0.0
    %460 = vmatpush2.msra.mxu0 0.0
    %461 = vmatprep.subr.mxu0 0.0
    %462 = vmatpush2.msra.mxu0 0.0
    %463 = vmatprep.mubr.f32.mxu0 0.0
    %464 = vmatmul.mubr.f32.gmra.mxu0 %v397
    %v465 = vpop.f32.mrf.mxu0
    %v466 = vadd.f32 %v153, %v465
    %v467 = vpop.f32.mrf.mxu0
    %468 = vdwg.mxu0
    %v469 = vld [vmem:[%s5] sm:$0xff]
    %v470 = vld [vmem:[%s5 + $0x8] sm:$0xff]
    %v471 = vld [vmem:[%s5 + $0x10] sm:$0xff]
    %v472 = vld [vmem:[%s5 + $0x18] sm:$0xff]
    %v473 = vld [vmem:[%s6] sm:$0x1]
    %v475 = vlaneseq
    %v476 = vshrl.u32 %v475, 7
    %v477 = vsub.s32 0, %v476
    %v478 = vrot.slane %v473, %v477
    %v481 = vsel %vm240, %v466, 0
    %483 = vmatprep.subr.mxu0 0.0
    %484 = vmatpush1.msra.mxu0 0.0
    %485 = vmatprep.subr.mxu0 0.0
    %486 = vmatpush1.msra.mxu0 0.0
    %487 = vmatprep.subr.mxu0 0.0
    %488 = vmatpush1.msra.mxu0 0.0
    %489 = vmatprep.subr.mxu0 0.0
    %490 = vmatpush1.msra.mxu0 0.0
    %491 = vmatprep.subr.mxu0 0.0
    %492 = vmatpush1.msra.mxu0 0.0
    %493 = vmatprep.subr.mxu0 0.0
    %494 = vmatpush1.msra.mxu0 0.0
    %495 = vmatprep.subr.mxu0 0.0
    %496 = vmatpush1.msra.mxu0 0.0
    %497 = vmatprep.subr.mxu0 0.0
    %498 = vmatpush1.msra.mxu0 0.0
    %499 = vmatprep.subr.mxu0 0.0
    %500 = vmatpush1.msra.mxu0 0.0
    %501 = vmatprep.subr.mxu0 0.0
    %502 = vmatpush1.msra.mxu0 0.0
    %503 = vmatprep.subr.mxu0 0.0
    %504 = vmatpush1.msra.mxu0 0.0
    %505 = vmatprep.subr.mxu0 0.0
    %506 = vmatpush1.msra.mxu0 0.0
    %507 = vmatprep.subr.mxu0 0.0
    %508 = vmatpush1.msra.mxu0 %v472
    %509 = vmatprep.subr.mxu0 0.0
    %510 = vmatpush1.msra.mxu0 %v471
    %511 = vmatprep.subr.mxu0 0.0
    %512 = vmatpush1.msra.mxu0 %v470
    %513 = vmatprep.subr.mxu0 0.0
    %514 = vmatpush1.msra.mxu0 %v469
    %515 = vmatprep.subr.mxu0 0.0
    %516 = vmatpush2.msra.mxu0 0.0
    %517 = vmatprep.subr.mxu0 0.0
    %518 = vmatpush2.msra.mxu0 0.0
    %519 = vmatprep.subr.mxu0 0.0
    %520 = vmatpush2.msra.mxu0 0.0
    %521 = vmatprep.subr.mxu0 0.0
    %522 = vmatpush2.msra.mxu0 0.0
    %523 = vmatprep.subr.mxu0 0.0
    %524 = vmatpush2.msra.mxu0 0.0
    %525 = vmatprep.subr.mxu0 0.0
    %526 = vmatpush2.msra.mxu0 0.0
    %527 = vmatprep.subr.mxu0 0.0
    %528 = vmatpush2.msra.mxu0 0.0
    %529 = vmatprep.subr.mxu0 0.0
    %530 = vmatpush2.msra.mxu0 0.0
    %531 = vmatprep.subr.mxu0 0.0
    %532 = vmatpush2.msra.mxu0 0.0
    %533 = vmatprep.subr.mxu0 0.0
    %534 = vmatpush2.msra.mxu0 0.0
    %535 = vmatprep.subr.mxu0 0.0
    %536 = vmatpush2.msra.mxu0 0.0
    %537 = vmatprep.subr.mxu0 0.0
    %538 = vmatpush2.msra.mxu0 0.0
    %539 = vmatprep.subr.mxu0 0.0
    %540 = vmatpush2.msra.mxu0 0.0
    %541 = vmatprep.subr.mxu0 0.0
    %542 = vmatpush2.msra.mxu0 0.0
    %543 = vmatprep.subr.mxu0 0.0
    %544 = vmatpush2.msra.mxu0 0.0
    %545 = vmatprep.subr.mxu0 0.0
    %546 = vmatpush2.msra.mxu0 0.0
    %547 = vmatprep.mubr.f32.mxu0 0.0
    %548 = vmatmul.mubr.f32.gmra.mxu0 %v481
    %v549 = vpop.f32.mrf.mxu0
    %v550 = vadd.f32 %v478, %v549
    %v551 = vpop.f32.mrf.mxu0
    %552 = vdwg.mxu0
    %v553 = vmul.f32 %v550, 0.35355338
    %vm554 = vcmask 64512
    %v556 = vsel %vm554, %v553, 0
    %v559 = vsel %vm554, %v311, 0
    %561 = vmatprep.subr.mxu0 0.0
    %562 = vmatpush1.xpose.msra.mxu0 0.0
    %563 = vmatprep.subr.mxu0 0.0
    %564 = vmatpush1.xpose.msra.mxu0 0.0
    %565 = vmatprep.subr.mxu0 0.0
    %566 = vmatpush1.xpose.msra.mxu0 0.0
    %567 = vmatprep.subr.mxu0 0.0
    %568 = vmatpush1.xpose.msra.mxu0 0.0
    %569 = vmatprep.subr.mxu0 0.0
    %570 = vmatpush1.xpose.msra.mxu0 0.0
    %571 = vmatprep.subr.mxu0 0.0
    %572 = vmatpush1.xpose.msra.mxu0 0.0
    %573 = vmatprep.subr.mxu0 0.0
    %574 = vmatpush1.xpose.msra.mxu0 0.0
    %575 = vmatprep.subr.mxu0 0.0
    %576 = vmatpush1.xpose.msra.mxu0 0.0
    %577 = vmatprep.subr.mxu0 0.0
    %578 = vmatpush1.xpose.msra.mxu0 0.0
    %579 = vmatprep.subr.mxu0 0.0
    %580 = vmatpush1.xpose.msra.mxu0 0.0
    %581 = vmatprep.subr.mxu0 0.0
    %582 = vmatpush1.xpose.msra.mxu0 0.0
    %583 = vmatprep.subr.mxu0 0.0
    %584 = vmatpush1.xpose.msra.mxu0 0.0
    %585 = vmatprep.subr.mxu0 0.0
    %586 = vmatpush1.xpose.msra.mxu0 0.0
    %587 = vmatprep.subr.mxu0 0.0
    %588 = vmatpush1.xpose.msra.mxu0 0.0
    %589 = vmatprep.subr.mxu0 0.0
    %590 = vmatpush1.xpose.msra.mxu0 0.0
    %591 = vmatprep.subr.mxu0 0.0
    %592 = vmatpush1.xpose.msra.mxu0 %v559
    %593 = vmatprep.subr.mxu0 0.0
    %594 = vmatpush2.xpose.msra.mxu0 0.0
    %595 = vmatprep.subr.mxu0 0.0
    %596 = vmatpush2.xpose.msra.mxu0 0.0
    %597 = vmatprep.subr.mxu0 0.0
    %598 = vmatpush2.xpose.msra.mxu0 0.0
    %599 = vmatprep.subr.mxu0 0.0
    %600 = vmatpush2.xpose.msra.mxu0 0.0
    %601 = vmatprep.subr.mxu0 0.0
    %602 = vmatpush2.xpose.msra.mxu0 0.0
    %603 = vmatprep.subr.mxu0 0.0
    %604 = vmatpush2.xpose.msra.mxu0 0.0
    %605 = vmatprep.subr.mxu0 0.0
    %606 = vmatpush2.xpose.msra.mxu0 0.0
    %607 = vmatprep.subr.mxu0 0.0
    %608 = vmatpush2.xpose.msra.mxu0 0.0
    %609 = vmatprep.subr.mxu0 0.0
    %610 = vmatpush2.xpose.msra.mxu0 0.0
    %611 = vmatprep.subr.mxu0 0.0
    %612 = vmatpush2.xpose.msra.mxu0 0.0
    %613 = vmatprep.subr.mxu0 0.0
    %614 = vmatpush2.xpose.msra.mxu0 0.0
    %615 = vmatprep.subr.mxu0 0.0
    %616 = vmatpush2.xpose.msra.mxu0 0.0
    %617 = vmatprep.subr.mxu0 0.0
    %618 = vmatpush2.xpose.msra.mxu0 0.0
    %619 = vmatprep.subr.mxu0 0.0
    %620 = vmatpush2.xpose.msra.mxu0 0.0
    %621 = vmatprep.subr.mxu0 0.0
    %622 = vmatpush2.xpose.msra.mxu0 0.0
    %623 = vmatprep.subr.mxu0 0.0
    %624 = vmatpush2.xpose.msra.mxu0 0.0
    %625 = vmatprep.mubr.f32.mxu0 0.0
    %626 = vmatmul.mubr.f32.gmra.mxu0 %v556
    %v627 = vpop.f32.mrf.mxu0
    %v628 = vadd.f32 0.0, %v627
    %v629 = vpop.f32.mrf.mxu0
    %630 = vdwg.mxu0
    %631 = vrot.lane.b32.xlu0 %v553, 120
    %v632 = vpop.permute.xlu0 %631
    %633 = vrot.lane.b32.xlu0 %v311, 120
    %v634 = vpop.permute.xlu0 %633
    %v635 = vsel %vm554, %v632, 0
    %v637 = vsel %vm554, %v634, 0
    %639 = vmatprep.subr.mxu0 0.0
    %640 = vmatpush1.xpose.msra.mxu0 0.0
    %641 = vmatprep.subr.mxu0 0.0
    %642 = vmatpush1.xpose.msra.mxu0 0.0
    %643 = vmatprep.subr.mxu0 0.0
    %644 = vmatpush1.xpose.msra.mxu0 0.0
    %645 = vmatprep.subr.mxu0 0.0
    %646 = vmatpush1.xpose.msra.mxu0 0.0
    %647 = vmatprep.subr.mxu0 0.0
    %648 = vmatpush1.xpose.msra.mxu0 0.0
    %649 = vmatprep.subr.mxu0 0.0
    %650 = vmatpush1.xpose.msra.mxu0 0.0
    %651 = vmatprep.subr.mxu0 0.0
    %652 = vmatpush1.xpose.msra.mxu0 0.0
    %653 = vmatprep.subr.mxu0 0.0
    %654 = vmatpush1.xpose.msra.mxu0 0.0
    %655 = vmatprep.subr.mxu0 0.0
    %656 = vmatpush1.xpose.msra.mxu0 0.0
    %657 = vmatprep.subr.mxu0 0.0
    %658 = vmatpush1.xpose.msra.mxu0 0.0
    %659 = vmatprep.subr.mxu0 0.0
    %660 = vmatpush1.xpose.msra.mxu0 0.0
    %661 = vmatprep.subr.mxu0 0.0
    %662 = vmatpush1.xpose.msra.mxu0 0.0
    %663 = vmatprep.subr.mxu0 0.0
    %664 = vmatpush1.xpose.msra.mxu0 0.0
    %665 = vmatprep.subr.mxu0 0.0
    %666 = vmatpush1.xpose.msra.mxu0 0.0
    %667 = vmatprep.subr.mxu0 0.0
    %668 = vmatpush1.xpose.msra.mxu0 0.0
    %669 = vmatprep.subr.mxu0 0.0
    %670 = vmatpush1.xpose.msra.mxu0 %v637
    %671 = vmatprep.subr.mxu0 0.0
    %672 = vmatpush2.xpose.msra.mxu0 0.0
    %673 = vmatprep.subr.mxu0 0.0
    %674 = vmatpush2.xpose.msra.mxu0 0.0
    %675 = vmatprep.subr.mxu0 0.0
    %676 = vmatpush2.xpose.msra.mxu0 0.0
    %677 = vmatprep.subr.mxu0 0.0
    %678 = vmatpush2.xpose.msra.mxu0 0.0
    %679 = vmatprep.subr.mxu0 0.0
    %680 = vmatpush2.xpose.msra.mxu0 0.0
    %681 = vmatprep.subr.mxu0 0.0
    %682 = vmatpush2.xpose.msra.mxu0 0.0
    %683 = vmatprep.subr.mxu0 0.0
    %684 = vmatpush2.xpose.msra.mxu0 0.0
    %685 = vmatprep.subr.mxu0 0.0
    %686 = vmatpush2.xpose.msra.mxu0 0.0
    %687 = vmatprep.subr.mxu0 0.0
    %688 = vmatpush2.xpose.msra.mxu0 0.0
    %689 = vmatprep.subr.mxu0 0.0
    %690 = vmatpush2.xpose.msra.mxu0 0.0
    %691 = vmatprep.subr.mxu0 0.0
    %692 = vmatpush2.xpose.msra.mxu0 0.0
    %693 = vmatprep.subr.mxu0 0.0
    %694 = vmatpush2.xpose.msra.mxu0 0.0
    %695 = vmatprep.subr.mxu0 0.0
    %696 = vmatpush2.xpose.msra.mxu0 0.0
    %697 = vmatprep.subr.mxu0 0.0
    %698 = vmatpush2.xpose.msra.mxu0 0.0
    %699 = vmatprep.subr.mxu0 0.0
    %700 = vmatpush2.xpose.msra.mxu0 0.0
    %701 = vmatprep.subr.mxu0 0.0
    %702 = vmatpush2.xpose.msra.mxu0 0.0
    %703 = vmatprep.mubr.f32.mxu0 0.0
    %704 = vmatmul.mubr.f32.gmra.mxu0 %v635
    %v705 = vpop.f32.mrf.mxu0
    %v706 = vadd.f32 0.0, %v705
    %v707 = vpop.f32.mrf.mxu0
    %708 = vdwg.mxu0
    %709 = vrot.lane.b32.xlu0 %v553, 112
    %v710 = vpop.permute.xlu0 %709
    %711 = vrot.lane.b32.xlu0 %v311, 112
    %v712 = vpop.permute.xlu0 %711
    %v713 = vsel %vm554, %v710, 0
    %v715 = vsel %vm554, %v712, 0
    %717 = vmatprep.subr.mxu0 0.0
    %718 = vmatpush1.xpose.msra.mxu0 0.0
    %719 = vmatprep.subr.mxu0 0.0
    %720 = vmatpush1.xpose.msra.mxu0 0.0
    %721 = vmatprep.subr.mxu0 0.0
    %722 = vmatpush1.xpose.msra.mxu0 0.0
    %723 = vmatprep.subr.mxu0 0.0
    %724 = vmatpush1.xpose.msra.mxu0 0.0
    %725 = vmatprep.subr.mxu0 0.0
    %726 = vmatpush1.xpose.msra.mxu0 0.0
    %727 = vmatprep.subr.mxu0 0.0
    %728 = vmatpush1.xpose.msra.mxu0 0.0
    %729 = vmatprep.subr.mxu0 0.0
    %730 = vmatpush1.xpose.msra.mxu0 0.0
    %731 = vmatprep.subr.mxu0 0.0
    %732 = vmatpush1.xpose.msra.mxu0 0.0
    %733 = vmatprep.subr.mxu0 0.0
    %734 = vmatpush1.xpose.msra.mxu0 0.0
    %735 = vmatprep.subr.mxu0 0.0
    %736 = vmatpush1.xpose.msra.mxu0 0.0
    %737 = vmatprep.subr.mxu0 0.0
    %738 = vmatpush1.xpose.msra.mxu0 0.0
    %739 = vmatprep.subr.mxu0 0.0
    %740 = vmatpush1.xpose.msra.mxu0 0.0
    %741 = vmatprep.subr.mxu0 0.0
    %742 = vmatpush1.xpose.msra.mxu0 0.0
    %743 = vmatprep.subr.mxu0 0.0
    %744 = vmatpush1.xpose.msra.mxu0 0.0
    %745 = vmatprep.subr.mxu0 0.0
    %746 = vmatpush1.xpose.msra.mxu0 0.0
    %747 = vmatprep.subr.mxu0 0.0
    %748 = vmatpush1.xpose.msra.mxu0 %v715
    %749 = vmatprep.subr.mxu0 0.0
    %750 = vmatpush2.xpose.msra.mxu0 0.0
    %751 = vmatprep.subr.mxu0 0.0
    %752 = vmatpush2.xpose.msra.mxu0 0.0
    %753 = vmatprep.subr.mxu0 0.0
    %754 = vmatpush2.xpose.msra.mxu0 0.0
    %755 = vmatprep.subr.mxu0 0.0
    %756 = vmatpush2.xpose.msra.mxu0 0.0
    %757 = vmatprep.subr.mxu0 0.0
    %758 = vmatpush2.xpose.msra.mxu0 0.0
    %759 = vmatprep.subr.mxu0 0.0
    %760 = vmatpush2.xpose.msra.mxu0 0.0
    %761 = vmatprep.subr.mxu0 0.0
    %762 = vmatpush2.xpose.msra.mxu0 0.0
    %763 = vmatprep.subr.mxu0 0.0
    %764 = vmatpush2.xpose.msra.mxu0 0.0
    %765 = vmatprep.subr.mxu0 0.0
    %766 = vmatpush2.xpose.msra.mxu0 0.0
    %767 = vmatprep.subr.mxu0 0.0
    %768 = vmatpush2.xpose.msra.mxu0 0.0
    %769 = vmatprep.subr.mxu0 0.0
    %770 = vmatpush2.xpose.msra.mxu0 0.0
    %771 = vmatprep.subr.mxu0 0.0
    %772 = vmatpush2.xpose.msra.mxu0 0.0
    %773 = vmatprep.subr.mxu0 0.0
    %774 = vmatpush2.xpose.msra.mxu0 0.0
    %775 = vmatprep.subr.mxu0 0.0
    %776 = vmatpush2.xpose.msra.mxu0 0.0
    %777 = vmatprep.subr.mxu0 0.0
    %778 = vmatpush2.xpose.msra.mxu0 0.0
    %779 = vmatprep.subr.mxu0 0.0
    %780 = vmatpush2.xpose.msra.mxu0 0.0
    %781 = vmatprep.mubr.f32.mxu0 0.0
    %782 = vmatmul.mubr.f32.gmra.mxu0 %v713
    %v783 = vpop.f32.mrf.mxu0
    %v784 = vadd.f32 0.0, %v783
    %v785 = vpop.f32.mrf.mxu0
    %786 = vdwg.mxu0
    %787 = vrot.lane.b32.xlu0 %v553, 104
    %v788 = vpop.permute.xlu0 %787
    %789 = vrot.lane.b32.xlu0 %v311, 104
    %v790 = vpop.permute.xlu0 %789
    %v791 = vsel %vm554, %v788, 0
    %v793 = vsel %vm554, %v790, 0
    %795 = vmatprep.subr.mxu0 0.0
    %796 = vmatpush1.xpose.msra.mxu0 0.0
    %797 = vmatprep.subr.mxu0 0.0
    %798 = vmatpush1.xpose.msra.mxu0 0.0
    %799 = vmatprep.subr.mxu0 0.0
    %800 = vmatpush1.xpose.msra.mxu0 0.0
    %801 = vmatprep.subr.mxu0 0.0
    %802 = vmatpush1.xpose.msra.mxu0 0.0
    %803 = vmatprep.subr.mxu0 0.0
    %804 = vmatpush1.xpose.msra.mxu0 0.0
    %805 = vmatprep.subr.mxu0 0.0
    %806 = vmatpush1.xpose.msra.mxu0 0.0
    %807 = vmatprep.subr.mxu0 0.0
    %808 = vmatpush1.xpose.msra.mxu0 0.0
    %809 = vmatprep.subr.mxu0 0.0
    %810 = vmatpush1.xpose.msra.mxu0 0.0
    %811 = vmatprep.subr.mxu0 0.0
    %812 = vmatpush1.xpose.msra.mxu0 0.0
    %813 = vmatprep.subr.mxu0 0.0
    %814 = vmatpush1.xpose.msra.mxu0 0.0
    %815 = vmatprep.subr.mxu0 0.0
    %816 = vmatpush1.xpose.msra.mxu0 0.0
    %817 = vmatprep.subr.mxu0 0.0
    %818 = vmatpush1.xpose.msra.mxu0 0.0
    %819 = vmatprep.subr.mxu0 0.0
    %820 = vmatpush1.xpose.msra.mxu0 0.0
    %821 = vmatprep.subr.mxu0 0.0
    %822 = vmatpush1.xpose.msra.mxu0 0.0
    %823 = vmatprep.subr.mxu0 0.0
    %824 = vmatpush1.xpose.msra.mxu0 0.0
    %825 = vmatprep.subr.mxu0 0.0
    %826 = vmatpush1.xpose.msra.mxu0 %v793
    %827 = vmatprep.subr.mxu0 0.0
    %828 = vmatpush2.xpose.msra.mxu0 0.0
    %829 = vmatprep.subr.mxu0 0.0
    %830 = vmatpush2.xpose.msra.mxu0 0.0
    %831 = vmatprep.subr.mxu0 0.0
    %832 = vmatpush2.xpose.msra.mxu0 0.0
    %833 = vmatprep.subr.mxu0 0.0
    %834 = vmatpush2.xpose.msra.mxu0 0.0
    %835 = vmatprep.subr.mxu0 0.0
    %836 = vmatpush2.xpose.msra.mxu0 0.0
    %837 = vmatprep.subr.mxu0 0.0
    %838 = vmatpush2.xpose.msra.mxu0 0.0
    %839 = vmatprep.subr.mxu0 0.0
    %840 = vmatpush2.xpose.msra.mxu0 0.0
    %841 = vmatprep.subr.mxu0 0.0
    %842 = vmatpush2.xpose.msra.mxu0 0.0
    %843 = vmatprep.subr.mxu0 0.0
    %844 = vmatpush2.xpose.msra.mxu0 0.0
    %845 = vmatprep.subr.mxu0 0.0
    %846 = vmatpush2.xpose.msra.mxu0 0.0
    %847 = vmatprep.subr.mxu0 0.0
    %848 = vmatpush2.xpose.msra.mxu0 0.0
    %849 = vmatprep.subr.mxu0 0.0
    %850 = vmatpush2.xpose.msra.mxu0 0.0
    %851 = vmatprep.subr.mxu0 0.0
    %852 = vmatpush2.xpose.msra.mxu0 0.0
    %853 = vmatprep.subr.mxu0 0.0
    %854 = vmatpush2.xpose.msra.mxu0 0.0
    %855 = vmatprep.subr.mxu0 0.0
    %856 = vmatpush2.xpose.msra.mxu0 0.0
    %857 = vmatprep.subr.mxu0 0.0
    %858 = vmatpush2.xpose.msra.mxu0 0.0
    %859 = vmatprep.mubr.f32.mxu0 0.0
    %860 = vmatmul.mubr.f32.gmra.mxu0 %v791
    %v861 = vpop.f32.mrf.mxu0
    %v862 = vadd.f32 0.0, %v861
    %v863 = vpop.f32.mrf.mxu0
    %864 = vdwg.mxu0
    %v865 = vsel %vm554, %v628, -inf
    %v866 = vsel %vm554, %v706, -inf
    %v867 = vsel %vm554, %v784, -inf
    %v868 = vsel %vm554, %v862, -inf
    %v869 = vmax.f32 %v865, %v866
    %v870 = vmax.f32 %v867, %v868
    %v871 = vmax.f32 %v869, %v870
    %v872 = vsub.f32 %v628, %v871
    %v873 = vsub.f32 %v706, %v871
    %v874 = vsub.f32 %v784, %v871
    %v875 = vsub.f32 %v862, %v871
    %v876 = vmul.f32 %v872, 1.442695
    %v877 = vpow.pop %v876
    %v878 = vmul.f32 %v873, 1.442695
    %v879 = vpow.pop %v878
    %v880 = vmul.f32 %v874, 1.442695
    %v881 = vpow.pop %v880
    %v882 = vmul.f32 %v875, 1.442695
    %v883 = vpow.pop %v882
    %v884 = vsel %vm554, %v877, 0.0
    %v885 = vsel %vm554, %v879, 0.0
    %v886 = vadd.f32 %v884, %v885
    %v887 = vsel %vm554, %v881, 0.0
    %v888 = vadd.f32 %v886, %v887
    %v889 = vsel %vm554, %v883, 0.0
    %v890 = vadd.f32 %v888, %v889
    %v891 = vrcp.pop %v890
    %v892 = vmul.f32 %v877, %v891
    %v893 = vmul.f32 %v879, %v891
    %v894 = vmul.f32 %v881, %v891
    %v895 = vmul.f32 %v883, %v891
    %v896 = vld [vmem:[#allocation8] sm:$0xf]
    %v897 = vunpack.c.l.bf16 %v896
    %vm898 = vcmp.gt.f32.partialorder %v897, 0.0
    %v899 = vsel %vm898, 1, 0
    %vm900 = vcmp.eq.s32.totalorder %v899, 1
    %v901 = vsel %vm900, %v892, 0.25
    %v902 = vsel %vm900, %v893, 0.25
    %v903 = vsel %vm900, %v894, 0.25
    %v904 = vsel %vm900, %v895, 0.25
    %v906 = vsel %vm554, %v901, 0
    %908 = vmatprep.subr.mxu0 0.0
    %909 = vmatpush1.msra.mxu0 0.0
    %910 = vmatprep.subr.mxu0 0.0
    %911 = vmatpush1.msra.mxu0 0.0
    %912 = vmatprep.subr.mxu0 0.0
    %913 = vmatpush1.msra.mxu0 0.0
    %914 = vmatprep.subr.mxu0 0.0
    %915 = vmatpush1.msra.mxu0 0.0
    %916 = vmatprep.subr.mxu0 0.0
    %917 = vmatpush1.msra.mxu0 0.0
    %918 = vmatprep.subr.mxu0 0.0
    %919 = vmatpush1.msra.mxu0 0.0
    %920 = vmatprep.subr.mxu0 0.0
    %921 = vmatpush1.msra.mxu0 0.0
    %922 = vmatprep.subr.mxu0 0.0
    %923 = vmatpush1.msra.mxu0 0.0
    %924 = vmatprep.subr.mxu0 0.0
    %925 = vmatpush1.msra.mxu0 0.0
    %926 = vmatprep.subr.mxu0 0.0
    %927 = vmatpush1.msra.mxu0 0.0
    %928 = vmatprep.subr.mxu0 0.0
    %929 = vmatpush1.msra.mxu0 0.0
    %930 = vmatprep.subr.mxu0 0.0
    %931 = vmatpush1.msra.mxu0 0.0
    %932 = vmatprep.subr.mxu0 0.0
    %933 = vmatpush1.msra.mxu0 0.0
    %934 = vmatprep.subr.mxu0 0.0
    %935 = vmatpush1.msra.mxu0 0.0
    %936 = vmatprep.subr.mxu0 0.0
    %937 = vmatpush1.msra.mxu0 0.0
    %938 = vmatprep.subr.mxu0 0.0
    %939 = vmatpush1.msra.mxu0 %v392
    %940 = vmatprep.subr.mxu0 0.0
    %941 = vmatpush2.msra.mxu0 0.0
    %942 = vmatprep.subr.mxu0 0.0
    %943 = vmatpush2.msra.mxu0 0.0
    %944 = vmatprep.subr.mxu0 0.0
    %945 = vmatpush2.msra.mxu0 0.0
    %946 = vmatprep.subr.mxu0 0.0
    %947 = vmatpush2.msra.mxu0 0.0
    %948 = vmatprep.subr.mxu0 0.0
    %949 = vmatpush2.msra.mxu0 0.0
    %950 = vmatprep.subr.mxu0 0.0
    %951 = vmatpush2.msra.mxu0 0.0
    %952 = vmatprep.subr.mxu0 0.0
    %953 = vmatpush2.msra.mxu0 0.0
    %954 = vmatprep.subr.mxu0 0.0
    %955 = vmatpush2.msra.mxu0 0.0
    %956 = vmatprep.subr.mxu0 0.0
    %957 = vmatpush2.msra.mxu0 0.0
    %958 = vmatprep.subr.mxu0 0.0
    %959 = vmatpush2.msra.mxu0 0.0
    %960 = vmatprep.subr.mxu0 0.0
    %961 = vmatpush2.msra.mxu0 0.0
    %962 = vmatprep.subr.mxu0 0.0
    %963 = vmatpush2.msra.mxu0 0.0
    %964 = vmatprep.subr.mxu0 0.0
    %965 = vmatpush2.msra.mxu0 0.0
    %966 = vmatprep.subr.mxu0 0.0
    %967 = vmatpush2.msra.mxu0 0.0
    %968 = vmatprep.subr.mxu0 0.0
    %969 = vmatpush2.msra.mxu0 0.0
    %970 = vmatprep.subr.mxu0 0.0
    %971 = vmatpush2.msra.mxu0 0.0
    %972 = vmatprep.mubr.f32.mxu0 0.0
    %973 = vmatmul.mubr.f32.gmra.mxu0 %v906
    %v974 = vpop.f32.mrf.mxu0
    %v975 = vadd.f32 0.0, %v974
    %v976 = vpop.f32.mrf.mxu0
    %977 = vdwg.mxu0
    %978 = vst.msk [vmem:[#allocation2] sm:$0xff] %vm554, %v975
    %980 = vrot.lane.b32.xlu0 %v392, 120
    %v981 = vpop.permute.xlu0 %980
    %v984 = vsel %vm554, %v902, 0
    %986 = vmatprep.subr.mxu0 0.0
    %987 = vmatpush1.msra.mxu0 0.0
    %988 = vmatprep.subr.mxu0 0.0
    %989 = vmatpush1.msra.mxu0 0.0
    %990 = vmatprep.subr.mxu0 0.0
    %991 = vmatpush1.msra.mxu0 0.0
    %992 = vmatprep.subr.mxu0 0.0
    %993 = vmatpush1.msra.mxu0 0.0
    %994 = vmatprep.subr.mxu0 0.0
    %995 = vmatpush1.msra.mxu0 0.0
    %996 = vmatprep.subr.mxu0 0.0
    %997 = vmatpush1.msra.mxu0 0.0
    %998 = vmatprep.subr.mxu0 0.0
    %999 = vmatpush1.msra.mxu0 0.0
    %1000 = vmatprep.subr.mxu0 0.0
    %1001 = vmatpush1.msra.mxu0 0.0
    %1002 = vmatprep.subr.mxu0 0.0
    %1003 = vmatpush1.msra.mxu0 0.0
    %1004 = vmatprep.subr.mxu0 0.0
    %1005 = vmatpush1.msra.mxu0 0.0
    %1006 = vmatprep.subr.mxu0 0.0
    %1007 = vmatpush1.msra.mxu0 0.0
    %1008 = vmatprep.subr.mxu0 0.0
    %1009 = vmatpush1.msra.mxu0 0.0
    %1010 = vmatprep.subr.mxu0 0.0
    %1011 = vmatpush1.msra.mxu0 0.0
    %1012 = vmatprep.subr.mxu0 0.0
    %1013 = vmatpush1.msra.mxu0 0.0
    %1014 = vmatprep.subr.mxu0 0.0
    %1015 = vmatpush1.msra.mxu0 0.0
    %1016 = vmatprep.subr.mxu0 0.0
    %1017 = vmatpush1.msra.mxu0 %v981
    %1018 = vmatprep.subr.mxu0 0.0
    %1019 = vmatpush2.msra.mxu0 0.0
    %1020 = vmatprep.subr.mxu0 0.0
    %1021 = vmatpush2.msra.mxu0 0.0
    %1022 = vmatprep.subr.mxu0 0.0
    %1023 = vmatpush2.msra.mxu0 0.0
    %1024 = vmatprep.subr.mxu0 0.0
    %1025 = vmatpush2.msra.mxu0 0.0
    %1026 = vmatprep.subr.mxu0 0.0
    %1027 = vmatpush2.msra.mxu0 0.0
    %1028 = vmatprep.subr.mxu0 0.0
    %1029 = vmatpush2.msra.mxu0 0.0
    %1030 = vmatprep.subr.mxu0 0.0
    %1031 = vmatpush2.msra.mxu0 0.0
    %1032 = vmatprep.subr.mxu0 0.0
    %1033 = vmatpush2.msra.mxu0 0.0
    %1034 = vmatprep.subr.mxu0 0.0
    %1035 = vmatpush2.msra.mxu0 0.0
    %1036 = vmatprep.subr.mxu0 0.0
    %1037 = vmatpush2.msra.mxu0 0.0
    %1038 = vmatprep.subr.mxu0 0.0
    %1039 = vmatpush2.msra.mxu0 0.0
    %1040 = vmatprep.subr.mxu0 0.0
    %1041 = vmatpush2.msra.mxu0 0.0
    %1042 = vmatprep.subr.mxu0 0.0
    %1043 = vmatpush2.msra.mxu0 0.0
    %1044 = vmatprep.subr.mxu0 0.0
    %1045 = vmatpush2.msra.mxu0 0.0
    %1046 = vmatprep.subr.mxu0 0.0
    %1047 = vmatpush2.msra.mxu0 0.0
    %1048 = vmatprep.subr.mxu0 0.0
    %1049 = vmatpush2.msra.mxu0 0.0
    %1050 = vmatprep.mubr.f32.mxu0 0.0
    %1051 = vmatmul.mubr.f32.gmra.mxu0 %v984
    %v1052 = vpop.f32.mrf.mxu0
    %v1053 = vadd.f32 0.0, %v1052
    %v1054 = vpop.f32.mrf.mxu0
    %1055 = vdwg.mxu0
    %1057 = vrot.lane.b32.xlu0 %v1053, 8
    %v1058 = vpop.permute.xlu0 %1057
    %vm1060 = vcmask 130112
    %1061 = vst.msk [vmem:[#allocation2] sm:$0xff] %vm1060, %v1058
    %1062 = vrot.lane.b32.xlu0 %v392, 112
    %v1063 = vpop.permute.xlu0 %1062
    %v1066 = vsel %vm554, %v903, 0
    %1068 = vmatprep.subr.mxu0 0.0
    %1069 = vmatpush1.msra.mxu0 0.0
    %1070 = vmatprep.subr.mxu0 0.0
    %1071 = vmatpush1.msra.mxu0 0.0
    %1072 = vmatprep.subr.mxu0 0.0
    %1073 = vmatpush1.msra.mxu0 0.0
    %1074 = vmatprep.subr.mxu0 0.0
    %1075 = vmatpush1.msra.mxu0 0.0
    %1076 = vmatprep.subr.mxu0 0.0
    %1077 = vmatpush1.msra.mxu0 0.0
    %1078 = vmatprep.subr.mxu0 0.0
    %1079 = vmatpush1.msra.mxu0 0.0
    %1080 = vmatprep.subr.mxu0 0.0
    %1081 = vmatpush1.msra.mxu0 0.0
    %1082 = vmatprep.subr.mxu0 0.0
    %1083 = vmatpush1.msra.mxu0 0.0
    %1084 = vmatprep.subr.mxu0 0.0
    %1085 = vmatpush1.msra.mxu0 0.0
    %1086 = vmatprep.subr.mxu0 0.0
    %1087 = vmatpush1.msra.mxu0 0.0
    %1088 = vmatprep.subr.mxu0 0.0
    %1089 = vmatpush1.msra.mxu0 0.0
    %1090 = vmatprep.subr.mxu0 0.0
    %1091 = vmatpush1.msra.mxu0 0.0
    %1092 = vmatprep.subr.mxu0 0.0
    %1093 = vmatpush1.msra.mxu0 0.0
    %1094 = vmatprep.subr.mxu0 0.0
    %1095 = vmatpush1.msra.mxu0 0.0
    %1096 = vmatprep.subr.mxu0 0.0
    %1097 = vmatpush1.msra.mxu0 0.0
    %1098 = vmatprep.subr.mxu0 0.0
    %1099 = vmatpush1.msra.mxu0 %v1063
    %1100 = vmatprep.subr.mxu0 0.0
    %1101 = vmatpush2.msra.mxu0 0.0
    %1102 = vmatprep.subr.mxu0 0.0
    %1103 = vmatpush2.msra.mxu0 0.0
    %1104 = vmatprep.subr.mxu0 0.0
    %1105 = vmatpush2.msra.mxu0 0.0
    %1106 = vmatprep.subr.mxu0 0.0
    %1107 = vmatpush2.msra.mxu0 0.0
    %1108 = vmatprep.subr.mxu0 0.0
    %1109 = vmatpush2.msra.mxu0 0.0
    %1110 = vmatprep.subr.mxu0 0.0
    %1111 = vmatpush2.msra.mxu0 0.0
    %1112 = vmatprep.subr.mxu0 0.0
    %1113 = vmatpush2.msra.mxu0 0.0
    %1114 = vmatprep.subr.mxu0 0.0
    %1115 = vmatpush2.msra.mxu0 0.0
    %1116 = vmatprep.subr.mxu0 0.0
    %1117 = vmatpush2.msra.mxu0 0.0
    %1118 = vmatprep.subr.mxu0 0.0
    %1119 = vmatpush2.msra.mxu0 0.0
    %1120 = vmatprep.subr.mxu0 0.0
    %1121 = vmatpush2.msra.mxu0 0.0
    %1122 = vmatprep.subr.mxu0 0.0
    %1123 = vmatpush2.msra.mxu0 0.0
    %1124 = vmatprep.subr.mxu0 0.0
    %1125 = vmatpush2.msra.mxu0 0.0
    %1126 = vmatprep.subr.mxu0 0.0
    %1127 = vmatpush2.msra.mxu0 0.0
    %1128 = vmatprep.subr.mxu0 0.0
    %1129 = vmatpush2.msra.mxu0 0.0
    %1130 = vmatprep.subr.mxu0 0.0
    %1131 = vmatpush2.msra.mxu0 0.0
    %1132 = vmatprep.mubr.f32.mxu0 0.0
    %1133 = vmatmul.mubr.f32.gmra.mxu0 %v1066
    %v1134 = vpop.f32.mrf.mxu0
    %v1135 = vadd.f32 0.0, %v1134
    %v1136 = vpop.f32.mrf.mxu0
    %1137 = vdwg.mxu0
    %1139 = vrot.lane.b32.xlu0 %v1135, 16
    %v1140 = vpop.permute.xlu0 %1139
    %vm1142 = vcmask 195712
    %1143 = vst.msk [vmem:[#allocation2] sm:$0xff] %vm1142, %v1140
    %1144 = vrot.lane.b32.xlu0 %v392, 104
    %v1145 = vpop.permute.xlu0 %1144
    %v1148 = vsel %vm554, %v904, 0
    %1150 = vmatprep.subr.mxu0 0.0
    %1151 = vmatpush1.msra.mxu0 0.0
    %1152 = vmatprep.subr.mxu0 0.0
    %1153 = vmatpush1.msra.mxu0 0.0
    %1154 = vmatprep.subr.mxu0 0.0
    %1155 = vmatpush1.msra.mxu0 0.0
    %1156 = vmatprep.subr.mxu0 0.0
    %1157 = vmatpush1.msra.mxu0 0.0
    %1158 = vmatprep.subr.mxu0 0.0
    %1159 = vmatpush1.msra.mxu0 0.0
    %1160 = vmatprep.subr.mxu0 0.0
    %1161 = vmatpush1.msra.mxu0 0.0
    %1162 = vmatprep.subr.mxu0 0.0
    %1163 = vmatpush1.msra.mxu0 0.0
    %1164 = vmatprep.subr.mxu0 0.0
    %1165 = vmatpush1.msra.mxu0 0.0
    %1166 = vmatprep.subr.mxu0 0.0
    %1167 = vmatpush1.msra.mxu0 0.0
    %1168 = vmatprep.subr.mxu0 0.0
    %1169 = vmatpush1.msra.mxu0 0.0
    %1170 = vmatprep.subr.mxu0 0.0
    %1171 = vmatpush1.msra.mxu0 0.0
    %1172 = vmatprep.subr.mxu0 0.0
    %1173 = vmatpush1.msra.mxu0 0.0
    %1174 = vmatprep.subr.mxu0 0.0
    %1175 = vmatpush1.msra.mxu0 0.0
    %1176 = vmatprep.subr.mxu0 0.0
    %1177 = vmatpush1.msra.mxu0 0.0
    %1178 = vmatprep.subr.mxu0 0.0
    %1179 = vmatpush1.msra.mxu0 0.0
    %1180 = vmatprep.subr.mxu0 0.0
    %1181 = vmatpush1.msra.mxu0 %v1145
    %1182 = vmatprep.subr.mxu0 0.0
    %1183 = vmatpush2.msra.mxu0 0.0
    %1184 = vmatprep.subr.mxu0 0.0
    %1185 = vmatpush2.msra.mxu0 0.0
    %1186 = vmatprep.subr.mxu0 0.0
    %1187 = vmatpush2.msra.mxu0 0.0
    %1188 = vmatprep.subr.mxu0 0.0
    %1189 = vmatpush2.msra.mxu0 0.0
    %1190 = vmatprep.subr.mxu0 0.0
    %1191 = vmatpush2.msra.mxu0 0.0
    %1192 = vmatprep.subr.mxu0 0.0
    %1193 = vmatpush2.msra.mxu0 0.0
    %1194 = vmatprep.subr.mxu0 0.0
    %1195 = vmatpush2.msra.mxu0 0.0
    %1196 = vmatprep.subr.mxu0 0.0
    %1197 = vmatpush2.msra.mxu0 0.0
    %1198 = vmatprep.subr.mxu0 0.0
    %1199 = vmatpush2.msra.mxu0 0.0
    %1200 = vmatprep.subr.mxu0 0.0
    %1201 = vmatpush2.msra.mxu0 0.0
    %1202 = vmatprep.subr.mxu0 0.0
    %1203 = vmatpush2.msra.mxu0 0.0
    %1204 = vmatprep.subr.mxu0 0.0
    %1205 = vmatpush2.msra.mxu0 0.0
    %1206 = vmatprep.subr.mxu0 0.0
    %1207 = vmatpush2.msra.mxu0 0.0
    %1208 = vmatprep.subr.mxu0 0.0
    %1209 = vmatpush2.msra.mxu0 0.0
    %1210 = vmatprep.subr.mxu0 0.0
    %1211 = vmatpush2.msra.mxu0 0.0
    %1212 = vmatprep.subr.mxu0 0.0
    %1213 = vmatpush2.msra.mxu0 0.0
    %1214 = vmatprep.mubr.f32.mxu0 0.0
    %1215 = vmatmul.mubr.f32.gmra.mxu0 %v1148
    %v1216 = vpop.f32.mrf.mxu0
    %v1217 = vadd.f32 0.0, %v1216
    %v1218 = vpop.f32.mrf.mxu0
    %1219 = vdwg.mxu0
    %1221 = vrot.lane.b32.xlu0 %v1217, 24
    %v1222 = vpop.permute.xlu0 %1221
    %vm1224 = vcmask 261312
    %1225 = vst.msk [vmem:[#allocation2] sm:$0xff] %vm1224, %v1222
    %v1226 = vld [vmem:[#allocation2] sm:$0xff]
    %v1227 = vld [vmem:[#allocation11] sm:$0xff]
    %v1228 = vld [vmem:[#allocation11 + $0x8] sm:$0xff]
    %v1229 = vld [vmem:[#allocation11 + $0x10] sm:$0xff]
    %v1230 = vld [vmem:[#allocation11 + $0x18] sm:$0xff]
    %v1231 = vld [vmem:[%s12] sm:$0x1]
    %v1233 = vlaneseq
    %v1234 = vshrl.u32 %v1233, 7
    %v1235 = vsub.s32 0, %v1234
    %v1236 = vrot.slane %v1231, %v1235
    %v1239 = vsel %vm240, %v1226, 0
    %1241 = vmatprep.subr.mxu0 0.0
    %1242 = vmatpush1.msra.mxu0 0.0
    %1243 = vmatprep.subr.mxu0 0.0
    %1244 = vmatpush1.msra.mxu0 0.0
    %1245 = vmatprep.subr.mxu0 0.0
    %1246 = vmatpush1.msra.mxu0 0.0
    %1247 = vmatprep.subr.mxu0 0.0
    %1248 = vmatpush1.msra.mxu0 0.0
    %1249 = vmatprep.subr.mxu0 0.0
    %1250 = vmatpush1.msra.mxu0 0.0
    %1251 = vmatprep.subr.mxu0 0.0
    %1252 = vmatpush1.msra.mxu0 0.0
    %1253 = vmatprep.subr.mxu0 0.0
    %1254 = vmatpush1.msra.mxu0 0.0
    %1255 = vmatprep.subr.mxu0 0.0
    %1256 = vmatpush1.msra.mxu0 0.0
    %1257 = vmatprep.subr.mxu0 0.0
    %1258 = vmatpush1.msra.mxu0 0.0
    %1259 = vmatprep.subr.mxu0 0.0
    %1260 = vmatpush1.msra.mxu0 0.0
    %1261 = vmatprep.subr.mxu0 0.0
    %1262 = vmatpush1.msra.mxu0 0.0
    %1263 = vmatprep.subr.mxu0 0.0
    %1264 = vmatpush1.msra.mxu0 0.0
    %1265 = vmatprep.subr.mxu0 0.0
    %1266 = vmatpush1.msra.mxu0 %v1230
    %1267 = vmatprep.subr.mxu0 0.0
    %1268 = vmatpush1.msra.mxu0 %v1229
    %1269 = vmatprep.subr.mxu0 0.0
    %1270 = vmatpush1.msra.mxu0 %v1228
    %1271 = vmatprep.subr.mxu0 0.0
    %1272 = vmatpush1.msra.mxu0 %v1227
    %1273 = vmatprep.subr.mxu0 0.0
    %1274 = vmatpush2.msra.mxu0 0.0
    %1275 = vmatprep.subr.mxu0 0.0
    %1276 = vmatpush2.msra.mxu0 0.0
    %1277 = vmatprep.subr.mxu0 0.0
    %1278 = vmatpush2.msra.mxu0 0.0
    %1279 = vmatprep.subr.mxu0 0.0
    %1280 = vmatpush2.msra.mxu0 0.0
    %1281 = vmatprep.subr.mxu0 0.0
    %1282 = vmatpush2.msra.mxu0 0.0
    %1283 = vmatprep.subr.mxu0 0.0
    %1284 = vmatpush2.msra.mxu0 0.0
    %1285 = vmatprep.subr.mxu0 0.0
    %1286 = vmatpush2.msra.mxu0 0.0
    %1287 = vmatprep.subr.mxu0 0.0
    %1288 = vmatpush2.msra.mxu0 0.0
    %1289 = vmatprep.subr.mxu0 0.0
    %1290 = vmatpush2.msra.mxu0 0.0
    %1291 = vmatprep.subr.mxu0 0.0
    %1292 = vmatpush2.msra.mxu0 0.0
    %1293 = vmatprep.subr.mxu0 0.0
    %1294 = vmatpush2.msra.mxu0 0.0
    %1295 = vmatprep.subr.mxu0 0.0
    %1296 = vmatpush2.msra.mxu0 0.0
    %1297 = vmatprep.subr.mxu0 0.0
    %1298 = vmatpush2.msra.mxu0 0.0
    %1299 = vmatprep.subr.mxu0 0.0
    %1300 = vmatpush2.msra.mxu0 0.0
    %1301 = vmatprep.subr.mxu0 0.0
    %1302 = vmatpush2.msra.mxu0 0.0
    %1303 = vmatprep.subr.mxu0 0.0
    %1304 = vmatpush2.msra.mxu0 0.0
    %1305 = vmatprep.mubr.f32.mxu0 0.0
    %1306 = vmatmul.mubr.f32.gmra.mxu0 %v1239
    %v1307 = vpop.f32.mrf.mxu0
    %v1308 = vadd.f32 %v1236, %v1307
    %v1309 = vpop.f32.mrf.mxu0
    %1310 = vdwg.mxu0
    %v1311 = vadd.f32 %v466, %v1308
    %v1312 = vsel %vm240, %v1311, 0.0
    %1313 = vadd.xlane.f32.xlu0 %v1312
    %v1314 = vpop.xlane.xlu0 %1313
    %v1315 = vrcp.pop 32.0
    %v1316 = vmul.f32 %v1314, %v1315
    %v1317 = vsub.f32 %v1311, %v1316
    %v1318 = vmul.f32 %v1317, %v1317
    %v1319 = vsel %vm240, %v1318, 0.0
    %1320 = vadd.xlane.f32.xlu0 %v1319
    %v1321 = vpop.xlane.xlu0 %1320
    %v1322 = vmul.f32 %v1321, %v1315
    %v1323 = vadd.f32 %v1322, 1e-05
    %v1324 = vrsqrt.pop %v1323
    %v1325 = vmul.f32 %v1317, %v1324
    %v1326 = vld [vmem:[%s17] sm:$0x1]
    %v1328 = vlaneseq
    %v1329 = vshrl.u32 %v1328, 7
    %v1330 = vsub.s32 0, %v1329
    %v1331 = vrot.slane %v1326, %v1330
    %v1333 = vmul.f32 %v1325, %v1331
    %v1334 = vld [vmem:[%s18] sm:$0x1]
    %v1336 = vlaneseq
    %v1337 = vshrl.u32 %v1336, 7
    %v1338 = vsub.s32 0, %v1337
    %v1339 = vrot.slane %v1334, %v1338
    %v1341 = vadd.f32 %v1333, %v1339
    %v1342 = vld [vmem:[#allocation12] sm:$0xff]
    %v1343 = vld [vmem:[#allocation12 + $0x8] sm:$0xff]
    %v1344 = vld [vmem:[#allocation12 + $0x10] sm:$0xff]
    %v1345 = vld [vmem:[#allocation12 + $0x18] sm:$0xff]
    %v1346 = vld [vmem:[%s14] sm:$0x1]
    %v1348 = vlaneseq
    %v1349 = vshrl.u32 %v1348, 7
    %v1350 = vsub.s32 0, %v1349
    %v1351 = vrot.slane %v1346, %v1350
    %v1354 = vsel %vm240, %v1341, 0
    %1356 = vmatprep.subr.mxu0 0.0
    %1357 = vmatpush1.msra.mxu0 0.0
    %1358 = vmatprep.subr.mxu0 0.0
    %1359 = vmatpush1.msra.mxu0 0.0
    %1360 = vmatprep.subr.mxu0 0.0
    %1361 = vmatpush1.msra.mxu0 0.0
    %1362 = vmatprep.subr.mxu0 0.0
    %1363 = vmatpush1.msra.mxu0 0.0
    %1364 = vmatprep.subr.mxu0 0.0
    %1365 = vmatpush1.msra.mxu0 0.0
    %1366 = vmatprep.subr.mxu0 0.0
    %1367 = vmatpush1.msra.mxu0 0.0
    %1368 = vmatprep.subr.mxu0 0.0
    %1369 = vmatpush1.msra.mxu0 0.0
    %1370 = vmatprep.subr.mxu0 0.0
    %1371 = vmatpush1.msra.mxu0 0.0
    %1372 = vmatprep.subr.mxu0 0.0
    %1373 = vmatpush1.msra.mxu0 0.0
    %1374 = vmatprep.subr.mxu0 0.0
    %1375 = vmatpush1.msra.mxu0 0.0
    %1376 = vmatprep.subr.mxu0 0.0
    %1377 = vmatpush1.msra.mxu0 0.0
    %1378 = vmatprep.subr.mxu0 0.0
    %1379 = vmatpush1.msra.mxu0 0.0
    %1380 = vmatprep.subr.mxu0 0.0
    %1381 = vmatpush1.msra.mxu0 %v1345
    %1382 = vmatprep.subr.mxu0 0.0
    %1383 = vmatpush1.msra.mxu0 %v1344
    %1384 = vmatprep.subr.mxu0 0.0
    %1385 = vmatpush1.msra.mxu0 %v1343
    %1386 = vmatprep.subr.mxu0 0.0
    %1387 = vmatpush1.msra.mxu0 %v1342
    %1388 = vmatprep.subr.mxu0 0.0
    %1389 = vmatpush2.msra.mxu0 0.0
    %1390 = vmatprep.subr.mxu0 0.0
    %1391 = vmatpush2.msra.mxu0 0.0
    %1392 = vmatprep.subr.mxu0 0.0
    %1393 = vmatpush2.msra.mxu0 0.0
    %1394 = vmatprep.subr.mxu0 0.0
    %1395 = vmatpush2.msra.mxu0 0.0
    %1396 = vmatprep.subr.mxu0 0.0
    %1397 = vmatpush2.msra.mxu0 0.0
    %1398 = vmatprep.subr.mxu0 0.0
    %1399 = vmatpush2.msra.mxu0 0.0
    %1400 = vmatprep.subr.mxu0 0.0
    %1401 = vmatpush2.msra.mxu0 0.0
    %1402 = vmatprep.subr.mxu0 0.0
    %1403 = vmatpush2.msra.mxu0 0.0
    %1404 = vmatprep.subr.mxu0 0.0
    %1405 = vmatpush2.msra.mxu0 0.0
    %1406 = vmatprep.subr.mxu0 0.0
    %1407 = vmatpush2.msra.mxu0 0.0
    %1408 = vmatprep.subr.mxu0 0.0
    %1409 = vmatpush2.msra.mxu0 0.0
    %1410 = vmatprep.subr.mxu0 0.0
    %1411 = vmatpush2.msra.mxu0 0.0
    %1412 = vmatprep.subr.mxu0 0.0
    %1413 = vmatpush2.msra.mxu0 0.0
    %1414 = vmatprep.subr.mxu0 0.0
    %1415 = vmatpush2.msra.mxu0 0.0
    %1416 = vmatprep.subr.mxu0 0.0
    %1417 = vmatpush2.msra.mxu0 0.0
    %1418 = vmatprep.subr.mxu0 0.0
    %1419 = vmatpush2.msra.mxu0 0.0
    %1420 = vmatprep.mubr.f32.mxu0 0.0
    %1421 = vmatmul.mubr.f32.gmra.mxu0 %v1354
    %v1422 = vpop.f32.mrf.mxu0
    %v1423 = vadd.f32 %v1351, %v1422
    %v1424 = vpop.f32.mrf.mxu0
    %1425 = vdwg.mxu0
    %v1426 = vmax.f32 %v1423, 0.0
    %v1427 = vld [vmem:[%s15] sm:$0xff]
    %v1428 = vld [vmem:[%s15 + $0x8] sm:$0xff]
    %v1429 = vld [vmem:[%s15 + $0x10] sm:$0xff]
    %v1430 = vld [vmem:[%s15 + $0x18] sm:$0xff]
    %v1431 = vld [vmem:[%s15 + $0x20] sm:$0xff]
    %v1432 = vld [vmem:[%s15 + $0x28] sm:$0xff]
    %v1433 = vld [vmem:[%s15 + $0x30] sm:$0xff]
    %v1434 = vld [vmem:[%s15 + $0x38] sm:$0xff]
    %v1435 = vld [vmem:[%s16] sm:$0x1]
    %v1437 = vlaneseq
    %v1438 = vshrl.u32 %v1437, 7
    %v1439 = vsub.s32 0, %v1438
    %v1440 = vrot.slane %v1435, %v1439
    %vm1442 = vcmask 523264
    %v1444 = vsel %vm1442, %v1426, 0
    %1446 = vmatprep.subr.mxu0 0.0
    %1447 = vmatpush1.msra.mxu0 0.0
    %1448 = vmatprep.subr.mxu0 0.0
    %1449 = vmatpush1.msra.mxu0 0.0
    %1450 = vmatprep.subr.mxu0 0.0
    %1451 = vmatpush1.msra.mxu0 0.0
    %1452 = vmatprep.subr.mxu0 0.0
    %1453 = vmatpush1.msra.mxu0 0.0
    %1454 = vmatprep.subr.mxu0 0.0
    %1455 = vmatpush1.msra.mxu0 0.0
    %1456 = vmatprep.subr.mxu0 0.0
    %1457 = vmatpush1.msra.mxu0 0.0
    %1458 = vmatprep.subr.mxu0 0.0
    %1459 = vmatpush1.msra.mxu0 0.0
    %1460 = vmatprep.subr.mxu0 0.0
    %1461 = vmatpush1.msra.mxu0 0.0
    %1462 = vmatprep.subr.mxu0 0.0
    %1463 = vmatpush1.msra.mxu0 %v1434
    %1464 = vmatprep.subr.mxu0 0.0
    %1465 = vmatpush1.msra.mxu0 %v1433
    %1466 = vmatprep.subr.mxu0 0.0
    %1467 = vmatpush1.msra.mxu0 %v1432
    %1468 = vmatprep.subr.mxu0 0.0
    %1469 = vmatpush1.msra.mxu0 %v1431
    %1470 = vmatprep.subr.mxu0 0.0
    %1471 = vmatpush1.msra.mxu0 %v1430
    %1472 = vmatprep.subr.mxu0 0.0
    %1473 = vmatpush1.msra.mxu0 %v1429
    %1474 = vmatprep.subr.mxu0 0.0
    %1475 = vmatpush1.msra.mxu0 %v1428
    %1476 = vmatprep.subr.mxu0 0.0
    %1477 = vmatpush1.msra.mxu0 %v1427
    %1478 = vmatprep.subr.mxu0 0.0
    %1479 = vmatpush2.msra.mxu0 0.0
    %1480 = vmatprep.subr.mxu0 0.0
    %1481 = vmatpush2.msra.mxu0 0.0
    %1482 = vmatprep.subr.mxu0 0.0
    %1483 = vmatpush2.msra.mxu0 0.0
    %1484 = vmatprep.subr.mxu0 0.0
    %1485 = vmatpush2.msra.mxu0 0.0
    %1486 = vmatprep.subr.mxu0 0.0
    %1487 = vmatpush2.msra.mxu0 0.0
    %1488 = vmatprep.subr.mxu0 0.0
    %1489 = vmatpush2.msra.mxu0 0.0
    %1490 = vmatprep.subr.mxu0 0.0
    %1491 = vmatpush2.msra.mxu0 0.0
    %1492 = vmatprep.subr.mxu0 0.0
    %1493 = vmatpush2.msra.mxu0 0.0
    %1494 = vmatprep.subr.mxu0 0.0
    %1495 = vmatpush2.msra.mxu0 0.0
    %1496 = vmatprep.subr.mxu0 0.0
    %1497 = vmatpush2.msra.mxu0 0.0
    %1498 = vmatprep.subr.mxu0 0.0
    %1499 = vmatpush2.msra.mxu0 0.0
    %1500 = vmatprep.subr.mxu0 0.0
    %1501 = vmatpush2.msra.mxu0 0.0
    %1502 = vmatprep.subr.mxu0 0.0
    %1503 = vmatpush2.msra.mxu0 0.0
    %1504 = vmatprep.subr.mxu0 0.0
    %1505 = vmatpush2.msra.mxu0 0.0
    %1506 = vmatprep.subr.mxu0 0.0
    %1507 = vmatpush2.msra.mxu0 0.0
    %1508 = vmatprep.subr.mxu0 0.0
    %1509 = vmatpush2.msra.mxu0 0.0
    %1510 = vmatprep.mubr.f32.mxu0 0.0
    %1511 = vmatmul.mubr.f32.gmra.mxu0 %v1444
    %v1512 = vpop.f32.mrf.mxu0
    %v1513 = vadd.f32 %v1440, %v1512
    %v1514 = vpop.f32.mrf.mxu0
    %1515 = vdwg.mxu0
    %v1516 = vadd.f32 %v1341, %v1513
    %v1517 = vsel %vm240, %v1516, 0.0
    %1518 = vadd.xlane.f32.xlu0 %v1517
    %v1519 = vpop.xlane.xlu0 %1518
    %v1520 = vmul.f32 %v1519, %v1315
    %v1521 = vsub.f32 %v1516, %v1520
    %v1522 = vmul.f32 %v1521, %v1521
    %v1523 = vsel %vm240, %v1522, 0.0
    %1524 = vadd.xlane.f32.xlu0 %v1523
    %v1525 = vpop.xlane.xlu0 %1524
    %v1526 = vmul.f32 %v1525, %v1315
    %v1527 = vadd.f32 %v1526, 1e-05
    %v1528 = vrsqrt.pop %v1527
    %v1529 = vmul.f32 %v1521, %v1528
    %v1530 = vld [vmem:[%s19] sm:$0x1]
    %v1532 = vlaneseq
    %v1533 = vshrl.u32 %v1532, 7
    %v1534 = vsub.s32 0, %v1533
    %v1535 = vrot.slane %v1530, %v1534
    %v1537 = vmul.f32 %v1529, %v1535
    %v1538 = vld [vmem:[%s20] sm:$0x1]
    %v1540 = vlaneseq
    %v1541 = vshrl.u32 %v1540, 7
    %v1542 = vsub.s32 0, %v1541
    %v1543 = vrot.slane %v1538, %v1542
    %v1545 = vadd.f32 %v1537, %v1543
    %1546 = vst.msk [vmem:[#allocation14] sm:$0xff] %vm240, %v1545
    // Predicated region
    $region110: #{tpu_custom_call.1} parent=1 // pred_check
      _
    $region111: #{tpu_custom_call.1} parent=1 // pred_check_branch
      %1548 = sbr.rel (0) target = $region113
    $region112: #{tpu_custom_call.1} parent=1 // pred_region
      %s1550 = ssub.s32 128, 128
      %1551 = vsyncadd [#allocation5], %s1550
      %s1553 = sshll.u32 [#allocation14], 4
      %s1554 = int_to_ptr.vmem [resolvable:$true] %s1553
      %1556 = dma.vmem_to_hbm [thread:$0]  %s1554, 128, %s21, [#allocation5]
    $region113: #{tpu_custom_call.1} parent=1 // pred_fallthru
      _
    // Predicated region
    $region114: #{tpu_custom_call.1} parent=1 // pred_check
      _
    $region115: #{tpu_custom_call.1} parent=1 // pred_check_branch
      %1558 = sbr.rel (0) target = $region117
    $region116: #{tpu_custom_call.1} parent=1 // pred_region
      %1559 = dma.done [#allocation5], 128
    $region117: #{tpu_custom_call.1} parent=1 // pred_fallthru
      _
    %1560 = vsyncpa [#allocation4], 1
    %1561 = vsyncpa [#allocation7], 1
    %1562 = vsyncpa [#allocation10], 1
    %1563 = vsyncpa [#allocation13], 1
    %1564 = vsyncpa [#allocation5], 1

</llo_original>
